<compile_context>
chip_gen: v5e
topology: v5e:2x2
jax: 0.10.0
libtpu: 0.0.40
codegen_flags: <defaults>
</compile_context>

<pallas_src>
import functools

import jax
import jax.numpy as jnp
from jax.experimental import pallas as pl
from jax.experimental.pallas import tpu as pltpu

EPS = 1e-5


def _gelu2(v):
    # 2*GELU(v): tanh-approximate GELU without the leading 0.5 (the 0.5 is
    # folded into the downstream scale / pointwise weights at pack time).
    c = 0.7978845608028654          # sqrt(2/pi)
    c3 = 0.044715 * c
    return v * (1.0 + jnp.tanh(v * (c + c3 * (v * v))))


# --------------------------------- kernel ----------------------------------

def patch_mixer_kernel(x_ref, dww_ref, dwb_ref, pww_ref, braff_ref,
                       cwgw_ref, cwgb_ref, c1aff_ref, o_ref,
                       *, kernel_sizes, seq_len):
    f32 = jnp.float32
    bf16 = jnp.bfloat16
    tb, cin, lp = x_ref.shape
    cout_p = o_ref.shape[1]                       # padded to a multiple of 8
    ks_max = max(kernel_sizes)
    dot = functools.partial(jnp.dot, preferred_element_type=f32)

    cwg_w = cwgw_ref[...]                         # (cout_p + 3, cin) bf16
    cwg_b = cwgb_ref[...]                         # (cout_p + 3, 1)   f32
    c1_w = cwg_w[:cout_p]                         # aligned slice (cout_p % 8 == 0)
    c1_b = cwg_b[:cout_p]
    c1_s = c1aff_ref[0]                           # (cout_p, 1) = 0.5 * bn scale
    c1_t = c1aff_ref[1]                           # (cout_p, 1)

    pos = jax.lax.broadcasted_iota(jnp.int32, (1, lp), 1)

    for t in range(tb):                           # static, small batch tile
        x = x_ref[t].astype(f32)                  # (cin, lp)
        xb = x.astype(bf16)

        # --- fused head matmul: Conv_1x1(x) pre-activation + weight_generator logits
        head = dot(cwg_w, xb) + cwg_b             # (cout_p + 3, lp) f32
        c1x_pre = head[:cout_p]
        l0 = head[cout_p:cout_p + 1]              # three (1, lp) logit rows
        l1 = head[cout_p + 1:cout_p + 2]
        l2 = head[cout_p + 2:cout_p + 3]
        m = jnp.maximum(jnp.maximum(l0, l1), l2)
        e0 = jnp.exp(l0 - m)
        e1 = jnp.exp(l1 - m)
        e2 = jnp.exp(l2 - m)
        inv = pl.reciprocal(e0 + e1 + e2, approx=True)
        wg = (e0 * inv, e1 * inv, e2 * inv)       # softmax over the 3 branches

        # --- per-branch: depthwise conv (true tap count) + GELU + fused 1x1 + GELU + BN2
        suma = jnp.zeros((cin, lp), f32)
        for i, ks in enumerate(kernel_sizes):
            pad_i = (ks - 1) // 2
            acc = None
            for k in range(ks):
                s = pad_i - k                     # lane shift for this tap
                if s == 0:
                    xs = x
                else:
                    xs = pltpu.roll(x, s % lp, axis=1)
                    if lp < seq_len + abs(s):     # wrapped lanes touch live data
                        valid = (pos >= s) if s > 0 else (pos < seq_len + s)
                        xs = jnp.where(valid, xs, 0.0)
                term = dww_ref[i * ks_max + k] * xs[None]   # (2,cin,1)*(1,cin,lp)
                acc = term if acc is None else acc + term
            h = _gelu2(acc + dwb_ref[i])                    # (2, cin, lp)
            h2 = h.reshape(2 * cin, lp).astype(bf16)        # (2cin, lp)
            aff = braff_ref[i]                              # (3, cin, 1)
            # pointwise 1x1 conv: BN1 + GELU's 0.5 already folded into the weights
            z = dot(pww_ref[i], h2) + aff[0]                # (cin, lp)
            zb = _gelu2(z) * aff[1] + aff[2]                # aff[1] = 0.5 * bn2 scale
            suma = suma + zb * wg[i]
        # TODO(synk): Dropout(0.2) layers are identity under eval/inference semantics.

        # --- Conv_1x1 on x (reused from the head matmul) and on suma, then sum.
        y_x = _gelu2(c1x_pre) * c1_s + c1_t
        y_s = _gelu2(dot(c1_w, suma.astype(bf16)) + c1_b) * c1_s + c1_t
        o_ref[t] = (y_x + y_s).astype(o_ref.dtype)


# --------------------------------- wrapper ---------------------------------

def patch_mixer_forward(x, params, *, batch_tile=2):
    B, Cin, L = x.shape
    kernel_sizes = tuple(params["kernel_sizes"])
    cout = params["cout"]
    cout_p = params["c1_aff"].shape[1]

    Lp = ((L + 127) // 128) * 128                 # lane-dense length
    # cap tb so the grid has >= 2 steps when B >= 2 (v7x megacore split)
    tb = max(1, min(batch_tile, max(1, B // 2)))
    Bp = ((B + tb - 1) // tb) * tb
    if (Bp, Lp) != (B, L):
        x = jnp.pad(x, ((0, Bp - B), (0, 0), (0, Lp - L)))

    weight_args = (params["dw_w"], params["dw_b"], params["pw_w"],
                   params["br_aff"], params["cwg_w"], params["cwg_b"],
                   params["c1_aff"])

    in_specs = ([pl.BlockSpec((tb, Cin, Lp), lambda b: (b, 0, 0))]
                + [pl.BlockSpec(a.shape, lambda b, _nd=a.ndim: (0,) * _nd)
                   for a in weight_args])

    kernel = functools.partial(patch_mixer_kernel,
                               kernel_sizes=kernel_sizes, seq_len=L)

    # TODO(synk): for very long L, add an L-tile grid axis with a halo so the
    # per-step tile stays bounded independent of L (v7x: 64 MiB VMEM).
    out = pl.pallas_call(
        kernel,
        out_shape=jax.ShapeDtypeStruct((Bp, cout_p, Lp), x.dtype),
        grid_spec=pltpu.PrefetchScalarGridSpec(
            num_scalar_prefetch=0,
            grid=(Bp // tb,),
            in_specs=in_specs,
            out_specs=pl.BlockSpec((tb, cout_p, Lp), lambda b: (b, 0, 0)),
        ),
        compiler_params=pltpu.CompilerParams(
            dimension_semantics=("parallel",),
            vmem_limit_bytes=48 * 1024 * 1024),
    )(x, *weight_args)

    return out[:B, :cout, :L]


# ---------------- parameter setup (deterministic, synthetic) ----------------

def init_params(key, input_dim, output_dim, kernel_sizes=(7, 5, 3)):
    keys = iter(jax.random.split(key, 64))

    def rnd(shape, scale=0.1):
        return scale * jax.random.normal(next(keys), shape, jnp.float32)

    raw = {"branches": []}
    for ks in kernel_sizes:
        raw["branches"].append({
            "dw_w": rnd((2 * input_dim, 1, ks)),
            "dw_b": rnd((2 * input_dim,)),
            "bn1_gamma": 1.0 + rnd((2 * input_dim,)),
            "bn1_beta": rnd((2 * input_dim,)),
            "bn1_mean": rnd((2 * input_dim,)),
            "bn1_var": 0.5 + jnp.abs(rnd((2 * input_dim,))),
            "pw_w": rnd((input_dim, 2 * input_dim, 1)),
            "pw_b": rnd((input_dim,)),
            "bn2_gamma": 1.0 + rnd((input_dim,)),
            "bn2_beta": rnd((input_dim,)),
            "bn2_mean": rnd((input_dim,)),
            "bn2_var": 0.5 + jnp.abs(rnd((input_dim,))),
        })
    raw["c1_w"] = rnd((output_dim, input_dim, 1))
    raw["c1_b"] = rnd((output_dim,))
    raw["c1_gamma"] = 1.0 + rnd((output_dim,))
    raw["c1_beta"] = rnd((output_dim,))
    raw["c1_mean"] = rnd((output_dim,))
    raw["c1_var"] = 0.5 + jnp.abs(rnd((output_dim,)))
    raw["wg_w"] = rnd((3, input_dim, 1))
    raw["wg_b"] = rnd((3,))
    return raw


def _fold_bn(gamma, beta, mean, var):
    s = gamma / jnp.sqrt(var + EPS)
    return s, beta - mean * s


def pack_kernel_params(raw, input_dim, kernel_sizes=(7, 5, 3)):
    # TODO(synk): eval-mode only — BatchNorm running stats are folded; train-mode
    # batch statistics / Dropout masks are not representable in this packing.
    cin = input_dim
    cout = raw["c1_w"].shape[0]
    cout_p = ((cout + 7) // 8) * 8                # sublane-aligned head rows
    ks_max = max(kernel_sizes)

    dw_w = jnp.zeros((3 * ks_max, 2, cin, 1), jnp.float32)   # left-aligned taps
    dw_b = jnp.zeros((3, 2, cin, 1), jnp.float32)
    pw_w = jnp.zeros((3, cin, 2 * cin), jnp.float32)
    br_aff = jnp.zeros((3, 3, cin, 1), jnp.float32)

    for i, (br, ks) in enumerate(zip(raw["branches"], kernel_sizes)):
        s1, t1 = _fold_bn(br["bn1_gamma"], br["bn1_beta"], br["bn1_mean"], br["bn1_var"])
        s2, t2 = _fold_bn(br["bn2_gamma"], br["bn2_beta"], br["bn2_mean"], br["bn2_var"])

        # depthwise: PyTorch out-channel o = 2c + m  ->  slot (m, c)
        w = br["dw_w"][:, 0, :]                                  # (2cin, ks)
        w_mc = w.reshape(cin, 2, ks).transpose(1, 0, 2)          # (2, cin, ks)
        dw_w = dw_w.at[i * ks_max:i * ks_max + ks].set(
            w_mc.transpose(2, 0, 1)[..., None])                  # (ks, 2, cin, 1)
        dw_b = dw_b.at[i].set(br["dw_b"].reshape(cin, 2).T[..., None])

        # pointwise 1x1 conv: fold BN1 (scale into columns, shift into bias) and
        # the 0.5 of the preceding GELU; reorder columns to the (m*cin + c) row
        # order of the kernel's reshaped depthwise output.
        pw = br["pw_w"][:, :, 0]                                 # (cin, 2cin), cols o=2c+m
        pw_f = 0.5 * pw * s1[None, :]
        pwb = br["pw_b"] + pw @ t1
        pw_perm = pw_f.reshape(cin, cin, 2).transpose(0, 2, 1).reshape(cin, 2 * cin)
        pw_w = pw_w.at[i].set(pw_perm)
        br_aff = br_aff.at[i].set(jnp.stack([pwb, 0.5 * s2, t2], 0)[..., None])

    c1_s, c1_t = _fold_bn(raw["c1_gamma"], raw["c1_beta"], raw["c1_mean"], raw["c1_var"])
    pad_o = cout_p - cout
    c1w = jnp.pad(raw["c1_w"][:, :, 0], ((0, pad_o), (0, 0)))
    c1b = jnp.pad(raw["c1_b"], (0, pad_o))
    cwg_w = jnp.concatenate([c1w, raw["wg_w"][:, :, 0]], axis=0)   # (cout_p+3, cin)
    cwg_b = jnp.concatenate([c1b, raw["wg_b"]], axis=0)[:, None]   # (cout_p+3, 1)
    c1_aff = jnp.stack([jnp.pad(0.5 * c1_s, (0, pad_o)),
                        jnp.pad(c1_t, (0, pad_o))], 0)[..., None]  # (2, cout_p, 1)

    return {"dw_w": dw_w, "dw_b": dw_b,
            "pw_w": pw_w.astype(jnp.bfloat16),
            "br_aff": br_aff,
            "cwg_w": cwg_w.astype(jnp.bfloat16),
            "cwg_b": cwg_b, "c1_aff": c1_aff,
            "cout": cout, "kernel_sizes": tuple(kernel_sizes)}


# ---------------- pure-JAX reference (mirrors the PyTorch forward) ----------------

def ref_forward(x, raw):
    gelu = lambda v: jax.nn.gelu(v, approximate=False)
    ein = functools.partial(jnp.einsum, precision=jax.lax.Precision.HIGHEST)
    B, Cin, L = x.shape

    def bn(v, g, b_, m, var):
        return ((v - m[None, :, None]) / jnp.sqrt(var + EPS)[None, :, None]
                ) * g[None, :, None] + b_[None, :, None]

    branch_outs = []
    for br in raw["branches"]:
        h = jax.lax.conv_general_dilated(
            x, br["dw_w"], window_strides=(1,), padding="SAME",
            dimension_numbers=("NCH", "OIH", "NCH"),
            feature_group_count=Cin,
            precision=jax.lax.Precision.HIGHEST)
        h = h + br["dw_b"][None, :, None]
        h = gelu(h)
        h = bn(h, br["bn1_gamma"], br["bn1_beta"], br["bn1_mean"], br["bn1_var"])
        h = ein("oc,bcl->bol", br["pw_w"][:, :, 0], h) + br["pw_b"][None, :, None]
        h = gelu(h)
        h = bn(h, br["bn2_gamma"], br["bn2_beta"], br["bn2_mean"], br["bn2_var"])
        branch_outs.append(h)

    wg = ein("oc,bcl->bol", raw["wg_w"][:, :, 0], x) + raw["wg_b"][None, :, None]
    wg = jax.nn.softmax(wg, axis=1)                           # (B, 3, L)
    suma = sum(branch_outs[i] * wg[:, i:i + 1, :] for i in range(3))

    def c1(v):
        y = ein("oc,bcl->bol", raw["c1_w"][:, :, 0], v) + raw["c1_b"][None, :, None]
        y = gelu(y)
        return bn(y, raw["c1_gamma"], raw["c1_beta"], raw["c1_mean"], raw["c1_var"])

    return c1(x) + c1(suma)


if __name__ == "__main__":
    B, Cin, Cout, L = 2, 8, 16, 128
    key = jax.random.PRNGKey(0)
    k_x, k_p = jax.random.split(key)
    x = jax.random.normal(k_x, (B, Cin, L), jnp.float32)

    raw = init_params(k_p, Cin, Cout)
    params = pack_kernel_params(raw, Cin)

    out = jax.block_until_ready(patch_mixer_forward(x, params))
    ref = jax.block_until_ready(ref_forward(x, raw))

    assert out.shape == (B, Cout, L), out.shape
    max_err = float(jnp.max(jnp.abs(out - ref)))
    # Tolerance covers the intentional approximations (tanh-GELU, bf16 MXU
    # operands, approx reciprocal in the softmax); typical max err is a few e-3.
    if not bool(jnp.allclose(out, ref, atol=1e-2, rtol=1e-2)):
        raise AssertionError(f"kernel/reference mismatch, max abs err = {max_err}")
    print("KERNEL_OK")
</pallas_src>

<mosaic_0001>
module attributes {stable_mosaic.version = 11 : i64} {
  func.func @patch_mixer_kernel(%arg0: i32, %arg1: memref<1x8x128xf32, #tpu.memory_space<vmem>>, %arg2: memref<21x2x8x1xf32, #tpu.memory_space<vmem>>, %arg3: memref<3x2x8x1xf32, #tpu.memory_space<vmem>>, %arg4: memref<3x8x16xbf16, #tpu.memory_space<vmem>>, %arg5: memref<3x3x8x1xf32, #tpu.memory_space<vmem>>, %arg6: memref<19x8xbf16, #tpu.memory_space<vmem>>, %arg7: memref<19x1xf32, #tpu.memory_space<vmem>>, %arg8: memref<2x16x1xf32, #tpu.memory_space<vmem>>, %arg9: memref<1x16x128xf32, #tpu.memory_space<vmem>>) attributes {dimension_semantics = [#tpu.dimension_semantics<parallel>], iteration_bounds = array<i64: 2>, scalar_prefetch = 0 : i64, scratch_operands = 0 : i64, tpu.core_type = #tpu.core_type<tc>, window_params = [{transform_indices = @transform_0, window_bounds = array<i64: 1, 8, 128>}, {pipeline_mode = #tpu.pipeline_mode<synchronous>, transform_indices = @transform_1, window_bounds = array<i64: 21, 2, 8, 1>}, {pipeline_mode = #tpu.pipeline_mode<synchronous>, transform_indices = @transform_2, window_bounds = array<i64: 3, 2, 8, 1>}, {pipeline_mode = #tpu.pipeline_mode<synchronous>, transform_indices = @transform_3, window_bounds = array<i64: 3, 8, 16>}, {pipeline_mode = #tpu.pipeline_mode<synchronous>, transform_indices = @transform_4, window_bounds = array<i64: 3, 3, 8, 1>}, {pipeline_mode = #tpu.pipeline_mode<synchronous>, transform_indices = @transform_5, window_bounds = array<i64: 19, 8>}, {pipeline_mode = #tpu.pipeline_mode<synchronous>, transform_indices = @transform_6, window_bounds = array<i64: 19, 1>}, {pipeline_mode = #tpu.pipeline_mode<synchronous>, transform_indices = @transform_7, window_bounds = array<i64: 2, 16, 1>}, {transform_indices = @transform_8, window_bounds = array<i64: 1, 16, 128>}]} {
    %c0 = arith.constant 0 : index
    %c0_0 = arith.constant 0 : index
    %0 = vector.load %arg6[%c0, %c0_0] : memref<19x8xbf16, #tpu.memory_space<vmem>>, vector<19x8xbf16>
    %c0_1 = arith.constant 0 : index
    %c0_2 = arith.constant 0 : index
    %1 = vector.load %arg7[%c0_1, %c0_2] : memref<19x1xf32, #tpu.memory_space<vmem>>, vector<19x1xf32>
    %2 = vector.extract_strided_slice %0 {offsets = [0, 0], sizes = [16, 8], strides = [1, 1]} : vector<19x8xbf16> to vector<16x8xbf16>
    %3 = vector.extract_strided_slice %1 {offsets = [0, 0], sizes = [16, 1], strides = [1, 1]} : vector<19x1xf32> to vector<16x1xf32>
    %c0_3 = arith.constant 0 : index
    %c0_4 = arith.constant 0 : index
    %c0_5 = arith.constant 0 : index
    %4 = vector.load %arg8[%c0_3, %c0_4, %c0_5] : memref<2x16x1xf32, #tpu.memory_space<vmem>>, vector<1x16x1xf32>
    %5 = vector.shape_cast %4 : vector<1x16x1xf32> to vector<16x1xf32>
    %c1 = arith.constant 1 : index
    %c0_6 = arith.constant 0 : index
    %c0_7 = arith.constant 0 : index
    %6 = vector.load %arg8[%c1, %c0_6, %c0_7] : memref<2x16x1xf32, #tpu.memory_space<vmem>>, vector<1x16x1xf32>
    %7 = vector.shape_cast %6 : vector<1x16x1xf32> to vector<16x1xf32>
    %8 = tpu.iota {dimensions = array<i32: 1>} : vector<1x128xi32>
    %c0_8 = arith.constant 0 : index
    %c0_9 = arith.constant 0 : index
    %c0_10 = arith.constant 0 : index
    %9 = vector.load %arg1[%c0_8, %c0_9, %c0_10] : memref<1x8x128xf32, #tpu.memory_space<vmem>>, vector<1x8x128xf32>
    %10 = vector.shape_cast %9 : vector<1x8x128xf32> to vector<8x128xf32>
    %11 = arith.truncf %10 : vector<8x128xf32> to vector<8x128xbf16>
    %cst = arith.constant dense<0.000000e+00> : vector<19x128xf32>
    %12 = tpu.matmul %0, %11, %cst {dimension_numbers = #tpu.dot_dimension_numbers<[1], [0], [0], [1], [0, 0, 1, 1], [], []>} : vector<19x8xbf16>, vector<8x128xbf16>, vector<19x128xf32> -> vector<19x128xf32>
    %13 = vector.broadcast %1 : vector<19x1xf32> to vector<19x128xf32>
    %14 = arith.addf %12, %13 : vector<19x128xf32>
    %15 = vector.extract_strided_slice %14 {offsets = [0, 0], sizes = [16, 128], strides = [1, 1]} : vector<19x128xf32> to vector<16x128xf32>
    %16 = vector.extract_strided_slice %14 {offsets = [16, 0], sizes = [1, 128], strides = [1, 1]} : vector<19x128xf32> to vector<1x128xf32>
    %17 = vector.extract_strided_slice %14 {offsets = [17, 0], sizes = [1, 128], strides = [1, 1]} : vector<19x128xf32> to vector<1x128xf32>
    %18 = vector.extract_strided_slice %14 {offsets = [18, 0], sizes = [1, 128], strides = [1, 1]} : vector<19x128xf32> to vector<1x128xf32>
    %19 = arith.maximumf %16, %17 : vector<1x128xf32>
    %20 = arith.maximumf %19, %18 : vector<1x128xf32>
    %21 = arith.subf %16, %20 : vector<1x128xf32>
    %22 = math.exp %21 : vector<1x128xf32>
    %23 = arith.subf %17, %20 : vector<1x128xf32>
    %24 = math.exp %23 : vector<1x128xf32>
    %25 = arith.subf %18, %20 : vector<1x128xf32>
    %26 = math.exp %25 : vector<1x128xf32>
    %27 = arith.addf %22, %24 : vector<1x128xf32>
    %28 = arith.addf %27, %26 : vector<1x128xf32>
    %29 = tpu.reciprocal %28 {approx = true} : vector<1x128xf32> -> vector<1x128xf32>
    %30 = arith.mulf %22, %29 : vector<1x128xf32>
    %31 = arith.mulf %24, %29 : vector<1x128xf32>
    %32 = arith.mulf %26, %29 : vector<1x128xf32>
    %cst_11 = arith.constant 0.000000e+00 : f32
    %33 = vector.broadcast %cst_11 : f32 to vector<8x128xf32>
    %c3_i32 = arith.constant 3 : i32
    %34 = tpu.dynamic_rotate %10 by %c3_i32 dim 1 : vector<8x128xf32>, i32 -> vector<8x128xf32>
    %c3_i32_12 = arith.constant 3 : i32
    %35 = vector.broadcast %c3_i32_12 : i32 to vector<1x128xi32>
    %36 = arith.cmpi sge, %8, %35 : vector<1x128xi32>
    %cst_13 = arith.constant 0.000000e+00 : f32
    %37 = vector.shape_cast %36 : vector<1x128xi1> to vector<1x128xi1>
    %38 = vector.broadcast %37 : vector<1x128xi1> to vector<8x128xi1>
    %39 = vector.broadcast %cst_13 : f32 to vector<8x128xf32>
    %40 = arith.select %38, %34, %39 : vector<8x128xi1>, vector<8x128xf32>
    %c0_14 = arith.constant 0 : index
    %c0_15 = arith.constant 0 : index
    %c0_16 = arith.constant 0 : index
    %c0_17 = arith.constant 0 : index
    %41 = vector.load %arg2[%c0_14, %c0_15, %c0_16, %c0_17] : memref<21x2x8x1xf32, #tpu.memory_space<vmem>>, vector<1x2x8x1xf32>
    %42 = vector.shape_cast %41 : vector<1x2x8x1xf32> to vector<2x8x1xf32>
    %43 = vector.shape_cast %40 : vector<8x128xf32> to vector<1x8x128xf32>
    %44 = vector.broadcast %42 : vector<2x8x1xf32> to vector<2x8x128xf32>
    %45 = vector.broadcast %43 : vector<1x8x128xf32> to vector<2x8x128xf32>
    %46 = arith.mulf %44, %45 : vector<2x8x128xf32>
    %c2_i32 = arith.constant 2 : i32
    %47 = tpu.dynamic_rotate %10 by %c2_i32 dim 1 : vector<8x128xf32>, i32 -> vector<8x128xf32>
    %c2_i32_18 = arith.constant 2 : i32
    %48 = vector.broadcast %c2_i32_18 : i32 to vector<1x128xi32>
    %49 = arith.cmpi sge, %8, %48 : vector<1x128xi32>
    %cst_19 = arith.constant 0.000000e+00 : f32
    %50 = vector.shape_cast %49 : vector<1x128xi1> to vector<1x128xi1>
    %51 = vector.broadcast %50 : vector<1x128xi1> to vector<8x128xi1>
    %52 = vector.broadcast %cst_19 : f32 to vector<8x128xf32>
    %53 = arith.select %51, %47, %52 : vector<8x128xi1>, vector<8x128xf32>
    %c1_20 = arith.constant 1 : index
    %c0_21 = arith.constant 0 : index
    %c0_22 = arith.constant 0 : index
    %c0_23 = arith.constant 0 : index
    %54 = vector.load %arg2[%c1_20, %c0_21, %c0_22, %c0_23] : memref<21x2x8x1xf32, #tpu.memory_space<vmem>>, vector<1x2x8x1xf32>
    %55 = vector.shape_cast %54 : vector<1x2x8x1xf32> to vector<2x8x1xf32>
    %56 = vector.shape_cast %53 : vector<8x128xf32> to vector<1x8x128xf32>
    %57 = vector.broadcast %55 : vector<2x8x1xf32> to vector<2x8x128xf32>
    %58 = vector.broadcast %56 : vector<1x8x128xf32> to vector<2x8x128xf32>
    %59 = arith.mulf %57, %58 : vector<2x8x128xf32>
    %60 = arith.addf %46, %59 : vector<2x8x128xf32>
    %c1_i32 = arith.constant 1 : i32
    %61 = tpu.dynamic_rotate %10 by %c1_i32 dim 1 : vector<8x128xf32>, i32 -> vector<8x128xf32>
    %c1_i32_24 = arith.constant 1 : i32
    %62 = vector.broadcast %c1_i32_24 : i32 to vector<1x128xi32>
    %63 = arith.cmpi sge, %8, %62 : vector<1x128xi32>
    %cst_25 = arith.constant 0.000000e+00 : f32
    %64 = vector.shape_cast %63 : vector<1x128xi1> to vector<1x128xi1>
    %65 = vector.broadcast %64 : vector<1x128xi1> to vector<8x128xi1>
    %66 = vector.broadcast %cst_25 : f32 to vector<8x128xf32>
    %67 = arith.select %65, %61, %66 : vector<8x128xi1>, vector<8x128xf32>
    %c2 = arith.constant 2 : index
    %c0_26 = arith.constant 0 : index
    %c0_27 = arith.constant 0 : index
    %c0_28 = arith.constant 0 : index
    %68 = vector.load %arg2[%c2, %c0_26, %c0_27, %c0_28] : memref<21x2x8x1xf32, #tpu.memory_space<vmem>>, vector<1x2x8x1xf32>
    %69 = vector.shape_cast %68 : vector<1x2x8x1xf32> to vector<2x8x1xf32>
    %70 = vector.shape_cast %67 : vector<8x128xf32> to vector<1x8x128xf32>
    %71 = vector.broadcast %69 : vector<2x8x1xf32> to vector<2x8x128xf32>
    %72 = vector.broadcast %70 : vector<1x8x128xf32> to vector<2x8x128xf32>
    %73 = arith.mulf %71, %72 : vector<2x8x128xf32>
    %74 = arith.addf %60, %73 : vector<2x8x128xf32>
    %c3 = arith.constant 3 : index
    %c0_29 = arith.constant 0 : index
    %c0_30 = arith.constant 0 : index
    %c0_31 = arith.constant 0 : index
    %75 = vector.load %arg2[%c3, %c0_29, %c0_30, %c0_31] : memref<21x2x8x1xf32, #tpu.memory_space<vmem>>, vector<1x2x8x1xf32>
    %76 = vector.shape_cast %75 : vector<1x2x8x1xf32> to vector<2x8x1xf32>
    %77 = vector.shape_cast %10 : vector<8x128xf32> to vector<1x8x128xf32>
    %78 = vector.broadcast %76 : vector<2x8x1xf32> to vector<2x8x128xf32>
    %79 = vector.broadcast %77 : vector<1x8x128xf32> to vector<2x8x128xf32>
    %80 = arith.mulf %78, %79 : vector<2x8x128xf32>
    %81 = arith.addf %74, %80 : vector<2x8x128xf32>
    %c127_i32 = arith.constant 127 : i32
    %82 = tpu.dynamic_rotate %10 by %c127_i32 dim 1 : vector<8x128xf32>, i32 -> vector<8x128xf32>
    %c127_i32_32 = arith.constant 127 : i32
    %83 = vector.broadcast %c127_i32_32 : i32 to vector<1x128xi32>
    %84 = arith.cmpi slt, %8, %83 : vector<1x128xi32>
    %cst_33 = arith.constant 0.000000e+00 : f32
    %85 = vector.shape_cast %84 : vector<1x128xi1> to vector<1x128xi1>
    %86 = vector.broadcast %85 : vector<1x128xi1> to vector<8x128xi1>
    %87 = vector.broadcast %cst_33 : f32 to vector<8x128xf32>
    %88 = arith.select %86, %82, %87 : vector<8x128xi1>, vector<8x128xf32>
    %c4 = arith.constant 4 : index
    %c0_34 = arith.constant 0 : index
    %c0_35 = arith.constant 0 : index
    %c0_36 = arith.constant 0 : index
    %89 = vector.load %arg2[%c4, %c0_34, %c0_35, %c0_36] : memref<21x2x8x1xf32, #tpu.memory_space<vmem>>, vector<1x2x8x1xf32>
    %90 = vector.shape_cast %89 : vector<1x2x8x1xf32> to vector<2x8x1xf32>
    %91 = vector.shape_cast %88 : vector<8x128xf32> to vector<1x8x128xf32>
    %92 = vector.broadcast %90 : vector<2x8x1xf32> to vector<2x8x128xf32>
    %93 = vector.broadcast %91 : vector<1x8x128xf32> to vector<2x8x128xf32>
    %94 = arith.mulf %92, %93 : vector<2x8x128xf32>
    %95 = arith.addf %81, %94 : vector<2x8x128xf32>
    %c126_i32 = arith.constant 126 : i32
    %96 = tpu.dynamic_rotate %10 by %c126_i32 dim 1 : vector<8x128xf32>, i32 -> vector<8x128xf32>
    %c126_i32_37 = arith.constant 126 : i32
    %97 = vector.broadcast %c126_i32_37 : i32 to vector<1x128xi32>
    %98 = arith.cmpi slt, %8, %97 : vector<1x128xi32>
    %cst_38 = arith.constant 0.000000e+00 : f32
    %99 = vector.shape_cast %98 : vector<1x128xi1> to vector<1x128xi1>
    %100 = vector.broadcast %99 : vector<1x128xi1> to vector<8x128xi1>
    %101 = vector.broadcast %cst_38 : f32 to vector<8x128xf32>
    %102 = arith.select %100, %96, %101 : vector<8x128xi1>, vector<8x128xf32>
    %c5 = arith.constant 5 : index
    %c0_39 = arith.constant 0 : index
    %c0_40 = arith.constant 0 : index
    %c0_41 = arith.constant 0 : index
    %103 = vector.load %arg2[%c5, %c0_39, %c0_40, %c0_41] : memref<21x2x8x1xf32, #tpu.memory_space<vmem>>, vector<1x2x8x1xf32>
    %104 = vector.shape_cast %103 : vector<1x2x8x1xf32> to vector<2x8x1xf32>
    %105 = vector.shape_cast %102 : vector<8x128xf32> to vector<1x8x128xf32>
    %106 = vector.broadcast %104 : vector<2x8x1xf32> to vector<2x8x128xf32>
    %107 = vector.broadcast %105 : vector<1x8x128xf32> to vector<2x8x128xf32>
    %108 = arith.mulf %106, %107 : vector<2x8x128xf32>
    %109 = arith.addf %95, %108 : vector<2x8x128xf32>
    %c125_i32 = arith.constant 125 : i32
    %110 = tpu.dynamic_rotate %10 by %c125_i32 dim 1 : vector<8x128xf32>, i32 -> vector<8x128xf32>
    %c125_i32_42 = arith.constant 125 : i32
    %111 = vector.broadcast %c125_i32_42 : i32 to vector<1x128xi32>
    %112 = arith.cmpi slt, %8, %111 : vector<1x128xi32>
    %cst_43 = arith.constant 0.000000e+00 : f32
    %113 = vector.shape_cast %112 : vector<1x128xi1> to vector<1x128xi1>
    %114 = vector.broadcast %113 : vector<1x128xi1> to vector<8x128xi1>
    %115 = vector.broadcast %cst_43 : f32 to vector<8x128xf32>
    %116 = arith.select %114, %110, %115 : vector<8x128xi1>, vector<8x128xf32>
    %c6 = arith.constant 6 : index
    %c0_44 = arith.constant 0 : index
    %c0_45 = arith.constant 0 : index
    %c0_46 = arith.constant 0 : index
    %117 = vector.load %arg2[%c6, %c0_44, %c0_45, %c0_46] : memref<21x2x8x1xf32, #tpu.memory_space<vmem>>, vector<1x2x8x1xf32>
    %118 = vector.shape_cast %117 : vector<1x2x8x1xf32> to vector<2x8x1xf32>
    %119 = vector.shape_cast %116 : vector<8x128xf32> to vector<1x8x128xf32>
    %120 = vector.broadcast %118 : vector<2x8x1xf32> to vector<2x8x128xf32>
    %121 = vector.broadcast %119 : vector<1x8x128xf32> to vector<2x8x128xf32>
    %122 = arith.mulf %120, %121 : vector<2x8x128xf32>
    %123 = arith.addf %109, %122 : vector<2x8x128xf32>
    %c0_47 = arith.constant 0 : index
    %c0_48 = arith.constant 0 : index
    %c0_49 = arith.constant 0 : index
    %c0_50 = arith.constant 0 : index
    %124 = vector.load %arg3[%c0_47, %c0_48, %c0_49, %c0_50] : memref<3x2x8x1xf32, #tpu.memory_space<vmem>>, vector<1x2x8x1xf32>
    %125 = vector.shape_cast %124 : vector<1x2x8x1xf32> to vector<2x8x1xf32>
    %126 = vector.broadcast %125 : vector<2x8x1xf32> to vector<2x8x128xf32>
    %127 = arith.addf %123, %126 : vector<2x8x128xf32>
    %128 = arith.mulf %127, %127 : vector<2x8x128xf32>
    %cst_51 = arith.constant 0.0356774069 : f32
    %129 = vector.broadcast %cst_51 : f32 to vector<2x8x128xf32>
    %130 = arith.mulf %129, %128 : vector<2x8x128xf32>
    %cst_52 = arith.constant 0.797884583 : f32
    %131 = vector.broadcast %cst_52 : f32 to vector<2x8x128xf32>
    %132 = arith.addf %131, %130 : vector<2x8x128xf32>
    %133 = arith.mulf %127, %132 : vector<2x8x128xf32>
    %134 = math.tanh %133 : vector<2x8x128xf32>
    %cst_53 = arith.constant 1.000000e+00 : f32
    %135 = vector.broadcast %cst_53 : f32 to vector<2x8x128xf32>
    %136 = arith.addf %135, %134 : vector<2x8x128xf32>
    %137 = arith.mulf %127, %136 : vector<2x8x128xf32>
    %138 = vector.shape_cast %137 : vector<2x8x128xf32> to vector<16x128xf32>
    %139 = arith.truncf %138 : vector<16x128xf32> to vector<16x128xbf16>
    %c0_54 = arith.constant 0 : index
    %c0_55 = arith.constant 0 : index
    %c0_56 = arith.constant 0 : index
    %c0_57 = arith.constant 0 : index
    %140 = vector.load %arg5[%c0_54, %c0_55, %c0_56, %c0_57] : memref<3x3x8x1xf32, #tpu.memory_space<vmem>>, vector<1x3x8x1xf32>
    %141 = vector.shape_cast %140 : vector<1x3x8x1xf32> to vector<3x8x1xf32>
    %c0_58 = arith.constant 0 : index
    %c0_59 = arith.constant 0 : index
    %c0_60 = arith.constant 0 : index
    %142 = vector.load %arg4[%c0_58, %c0_59, %c0_60] : memref<3x8x16xbf16, #tpu.memory_space<vmem>>, vector<1x8x16xbf16>
    %143 = vector.shape_cast %142 : vector<1x8x16xbf16> to vector<8x16xbf16>
    %cst_61 = arith.constant dense<0.000000e+00> : vector<8x128xf32>
    %144 = tpu.matmul %143, %139, %cst_61 {dimension_numbers = #tpu.dot_dimension_numbers<[1], [0], [0], [1], [0, 0, 1, 1], [], []>} : vector<8x16xbf16>, vector<16x128xbf16>, vector<8x128xf32> -> vector<8x128xf32>
    %145 = vector.extract_strided_slice %141 {offsets = [0, 0, 0], sizes = [1, 8, 1], strides = [1, 1, 1]} : vector<3x8x1xf32> to vector<1x8x1xf32>
    %146 = vector.shape_cast %145 : vector<1x8x1xf32> to vector<8x1xf32>
    %147 = vector.broadcast %146 : vector<8x1xf32> to vector<8x128xf32>
    %148 = arith.addf %144, %147 : vector<8x128xf32>
    %149 = arith.mulf %148, %148 : vector<8x128xf32>
    %cst_62 = arith.constant 0.0356774069 : f32
    %150 = vector.broadcast %cst_62 : f32 to vector<8x128xf32>
    %151 = arith.mulf %150, %149 : vector<8x128xf32>
    %cst_63 = arith.constant 0.797884583 : f32
    %152 = vector.broadcast %cst_63 : f32 to vector<8x128xf32>
    %153 = arith.addf %152, %151 : vector<8x128xf32>
    %154 = arith.mulf %148, %153 : vector<8x128xf32>
    %155 = math.tanh %154 : vector<8x128xf32>
    %cst_64 = arith.constant 1.000000e+00 : f32
    %156 = vector.broadcast %cst_64 : f32 to vector<8x128xf32>
    %157 = arith.addf %156, %155 : vector<8x128xf32>
    %158 = arith.mulf %148, %157 : vector<8x128xf32>
    %159 = vector.extract_strided_slice %141 {offsets = [1, 0, 0], sizes = [1, 8, 1], strides = [1, 1, 1]} : vector<3x8x1xf32> to vector<1x8x1xf32>
    %160 = vector.shape_cast %159 : vector<1x8x1xf32> to vector<8x1xf32>
    %161 = vector.broadcast %160 : vector<8x1xf32> to vector<8x128xf32>
    %162 = arith.mulf %158, %161 : vector<8x128xf32>
    %163 = vector.extract_strided_slice %141 {offsets = [2, 0, 0], sizes = [1, 8, 1], strides = [1, 1, 1]} : vector<3x8x1xf32> to vector<1x8x1xf32>
    %164 = vector.shape_cast %163 : vector<1x8x1xf32> to vector<8x1xf32>
    %165 = vector.broadcast %164 : vector<8x1xf32> to vector<8x128xf32>
    %166 = arith.addf %162, %165 : vector<8x128xf32>
    %167 = vector.broadcast %30 : vector<1x128xf32> to vector<8x128xf32>
    %168 = arith.mulf %166, %167 : vector<8x128xf32>
    %169 = arith.addf %33, %168 : vector<8x128xf32>
    %c2_i32_65 = arith.constant 2 : i32
    %170 = tpu.dynamic_rotate %10 by %c2_i32_65 dim 1 : vector<8x128xf32>, i32 -> vector<8x128xf32>
    %c2_i32_66 = arith.constant 2 : i32
    %171 = vector.broadcast %c2_i32_66 : i32 to vector<1x128xi32>
    %172 = arith.cmpi sge, %8, %171 : vector<1x128xi32>
    %cst_67 = arith.constant 0.000000e+00 : f32
    %173 = vector.shape_cast %172 : vector<1x128xi1> to vector<1x128xi1>
    %174 = vector.broadcast %173 : vector<1x128xi1> to vector<8x128xi1>
    %175 = vector.broadcast %cst_67 : f32 to vector<8x128xf32>
    %176 = arith.select %174, %170, %175 : vector<8x128xi1>, vector<8x128xf32>
    %c7 = arith.constant 7 : index
    %c0_68 = arith.constant 0 : index
    %c0_69 = arith.constant 0 : index
    %c0_70 = arith.constant 0 : index
    %177 = vector.load %arg2[%c7, %c0_68, %c0_69, %c0_70] : memref<21x2x8x1xf32, #tpu.memory_space<vmem>>, vector<1x2x8x1xf32>
    %178 = vector.shape_cast %177 : vector<1x2x8x1xf32> to vector<2x8x1xf32>
    %179 = vector.shape_cast %176 : vector<8x128xf32> to vector<1x8x128xf32>
    %180 = vector.broadcast %178 : vector<2x8x1xf32> to vector<2x8x128xf32>
    %181 = vector.broadcast %179 : vector<1x8x128xf32> to vector<2x8x128xf32>
    %182 = arith.mulf %180, %181 : vector<2x8x128xf32>
    %c1_i32_71 = arith.constant 1 : i32
    %183 = tpu.dynamic_rotate %10 by %c1_i32_71 dim 1 : vector<8x128xf32>, i32 -> vector<8x128xf32>
    %c1_i32_72 = arith.constant 1 : i32
    %184 = vector.broadcast %c1_i32_72 : i32 to vector<1x128xi32>
    %185 = arith.cmpi sge, %8, %184 : vector<1x128xi32>
    %cst_73 = arith.constant 0.000000e+00 : f32
    %186 = vector.shape_cast %185 : vector<1x128xi1> to vector<1x128xi1>
    %187 = vector.broadcast %186 : vector<1x128xi1> to vector<8x128xi1>
    %188 = vector.broadcast %cst_73 : f32 to vector<8x128xf32>
    %189 = arith.select %187, %183, %188 : vector<8x128xi1>, vector<8x128xf32>
    %c8 = arith.constant 8 : index
    %c0_74 = arith.constant 0 : index
    %c0_75 = arith.constant 0 : index
    %c0_76 = arith.constant 0 : index
    %190 = vector.load %arg2[%c8, %c0_74, %c0_75, %c0_76] : memref<21x2x8x1xf32, #tpu.memory_space<vmem>>, vector<1x2x8x1xf32>
    %191 = vector.shape_cast %190 : vector<1x2x8x1xf32> to vector<2x8x1xf32>
    %192 = vector.shape_cast %189 : vector<8x128xf32> to vector<1x8x128xf32>
    %193 = vector.broadcast %191 : vector<2x8x1xf32> to vector<2x8x128xf32>
    %194 = vector.broadcast %192 : vector<1x8x128xf32> to vector<2x8x128xf32>
    %195 = arith.mulf %193, %194 : vector<2x8x128xf32>
    %196 = arith.addf %182, %195 : vector<2x8x128xf32>
    %c9 = arith.constant 9 : index
    %c0_77 = arith.constant 0 : index
    %c0_78 = arith.constant 0 : index
    %c0_79 = arith.constant 0 : index
    %197 = vector.load %arg2[%c9, %c0_77, %c0_78, %c0_79] : memref<21x2x8x1xf32, #tpu.memory_space<vmem>>, vector<1x2x8x1xf32>
    %198 = vector.shape_cast %197 : vector<1x2x8x1xf32> to vector<2x8x1xf32>
    %199 = vector.shape_cast %10 : vector<8x128xf32> to vector<1x8x128xf32>
    %200 = vector.broadcast %198 : vector<2x8x1xf32> to vector<2x8x128xf32>
    %201 = vector.broadcast %199 : vector<1x8x128xf32> to vector<2x8x128xf32>
    %202 = arith.mulf %200, %201 : vector<2x8x128xf32>
    %203 = arith.addf %196, %202 : vector<2x8x128xf32>
    %c127_i32_80 = arith.constant 127 : i32
    %204 = tpu.dynamic_rotate %10 by %c127_i32_80 dim 1 : vector<8x128xf32>, i32 -> vector<8x128xf32>
    %c127_i32_81 = arith.constant 127 : i32
    %205 = vector.broadcast %c127_i32_81 : i32 to vector<1x128xi32>
    %206 = arith.cmpi slt, %8, %205 : vector<1x128xi32>
    %cst_82 = arith.constant 0.000000e+00 : f32
    %207 = vector.shape_cast %206 : vector<1x128xi1> to vector<1x128xi1>
    %208 = vector.broadcast %207 : vector<1x128xi1> to vector<8x128xi1>
    %209 = vector.broadcast %cst_82 : f32 to vector<8x128xf32>
    %210 = arith.select %208, %204, %209 : vector<8x128xi1>, vector<8x128xf32>
    %c10 = arith.constant 10 : index
    %c0_83 = arith.constant 0 : index
    %c0_84 = arith.constant 0 : index
    %c0_85 = arith.constant 0 : index
    %211 = vector.load %arg2[%c10, %c0_83, %c0_84, %c0_85] : memref<21x2x8x1xf32, #tpu.memory_space<vmem>>, vector<1x2x8x1xf32>
    %212 = vector.shape_cast %211 : vector<1x2x8x1xf32> to vector<2x8x1xf32>
    %213 = vector.shape_cast %210 : vector<8x128xf32> to vector<1x8x128xf32>
    %214 = vector.broadcast %212 : vector<2x8x1xf32> to vector<2x8x128xf32>
    %215 = vector.broadcast %213 : vector<1x8x128xf32> to vector<2x8x128xf32>
    %216 = arith.mulf %214, %215 : vector<2x8x128xf32>
    %217 = arith.addf %203, %216 : vector<2x8x128xf32>
    %c126_i32_86 = arith.constant 126 : i32
    %218 = tpu.dynamic_rotate %10 by %c126_i32_86 dim 1 : vector<8x128xf32>, i32 -> vector<8x128xf32>
    %c126_i32_87 = arith.constant 126 : i32
    %219 = vector.broadcast %c126_i32_87 : i32 to vector<1x128xi32>
    %220 = arith.cmpi slt, %8, %219 : vector<1x128xi32>
    %cst_88 = arith.constant 0.000000e+00 : f32
    %221 = vector.shape_cast %220 : vector<1x128xi1> to vector<1x128xi1>
    %222 = vector.broadcast %221 : vector<1x128xi1> to vector<8x128xi1>
    %223 = vector.broadcast %cst_88 : f32 to vector<8x128xf32>
    %224 = arith.select %222, %218, %223 : vector<8x128xi1>, vector<8x128xf32>
    %c11 = arith.constant 11 : index
    %c0_89 = arith.constant 0 : index
    %c0_90 = arith.constant 0 : index
    %c0_91 = arith.constant 0 : index
    %225 = vector.load %arg2[%c11, %c0_89, %c0_90, %c0_91] : memref<21x2x8x1xf32, #tpu.memory_space<vmem>>, vector<1x2x8x1xf32>
    %226 = vector.shape_cast %225 : vector<1x2x8x1xf32> to vector<2x8x1xf32>
    %227 = vector.shape_cast %224 : vector<8x128xf32> to vector<1x8x128xf32>
    %228 = vector.broadcast %226 : vector<2x8x1xf32> to vector<2x8x128xf32>
    %229 = vector.broadcast %227 : vector<1x8x128xf32> to vector<2x8x128xf32>
    %230 = arith.mulf %228, %229 : vector<2x8x128xf32>
    %231 = arith.addf %217, %230 : vector<2x8x128xf32>
    %c1_92 = arith.constant 1 : index
    %c0_93 = arith.constant 0 : index
    %c0_94 = arith.constant 0 : index
    %c0_95 = arith.constant 0 : index
    %232 = vector.load %arg3[%c1_92, %c0_93, %c0_94, %c0_95] : memref<3x2x8x1xf32, #tpu.memory_space<vmem>>, vector<1x2x8x1xf32>
    %233 = vector.shape_cast %232 : vector<1x2x8x1xf32> to vector<2x8x1xf32>
    %234 = vector.broadcast %233 : vector<2x8x1xf32> to vector<2x8x128xf32>
    %235 = arith.addf %231, %234 : vector<2x8x128xf32>
    %236 = arith.mulf %235, %235 : vector<2x8x128xf32>
    %cst_96 = arith.constant 0.0356774069 : f32
    %237 = vector.broadcast %cst_96 : f32 to vector<2x8x128xf32>
    %238 = arith.mulf %237, %236 : vector<2x8x128xf32>
    %cst_97 = arith.constant 0.797884583 : f32
    %239 = vector.broadcast %cst_97 : f32 to vector<2x8x128xf32>
    %240 = arith.addf %239, %238 : vector<2x8x128xf32>
    %241 = arith.mulf %235, %240 : vector<2x8x128xf32>
    %242 = math.tanh %241 : vector<2x8x128xf32>
    %cst_98 = arith.constant 1.000000e+00 : f32
    %243 = vector.broadcast %cst_98 : f32 to vector<2x8x128xf32>
    %244 = arith.addf %243, %242 : vector<2x8x128xf32>
    %245 = arith.mulf %235, %244 : vector<2x8x128xf32>
    %246 = vector.shape_cast %245 : vector<2x8x128xf32> to vector<16x128xf32>
    %247 = arith.truncf %246 : vector<16x128xf32> to vector<16x128xbf16>
    %c1_99 = arith.constant 1 : index
    %c0_100 = arith.constant 0 : index
    %c0_101 = arith.constant 0 : index
    %c0_102 = arith.constant 0 : index
    %248 = vector.load %arg5[%c1_99, %c0_100, %c0_101, %c0_102] : memref<3x3x8x1xf32, #tpu.memory_space<vmem>>, vector<1x3x8x1xf32>
    %249 = vector.shape_cast %248 : vector<1x3x8x1xf32> to vector<3x8x1xf32>
    %c1_103 = arith.constant 1 : index
    %c0_104 = arith.constant 0 : index
    %c0_105 = arith.constant 0 : index
    %250 = vector.load %arg4[%c1_103, %c0_104, %c0_105] : memref<3x8x16xbf16, #tpu.memory_space<vmem>>, vector<1x8x16xbf16>
    %251 = vector.shape_cast %250 : vector<1x8x16xbf16> to vector<8x16xbf16>
    %cst_106 = arith.constant dense<0.000000e+00> : vector<8x128xf32>
    %252 = tpu.matmul %251, %247, %cst_106 {dimension_numbers = #tpu.dot_dimension_numbers<[1], [0], [0], [1], [0, 0, 1, 1], [], []>} : vector<8x16xbf16>, vector<16x128xbf16>, vector<8x128xf32> -> vector<8x128xf32>
    %253 = vector.extract_strided_slice %249 {offsets = [0, 0, 0], sizes = [1, 8, 1], strides = [1, 1, 1]} : vector<3x8x1xf32> to vector<1x8x1xf32>
    %254 = vector.shape_cast %253 : vector<1x8x1xf32> to vector<8x1xf32>
    %255 = vector.broadcast %254 : vector<8x1xf32> to vector<8x128xf32>
    %256 = arith.addf %252, %255 : vector<8x128xf32>
    %257 = arith.mulf %256, %256 : vector<8x128xf32>
    %cst_107 = arith.constant 0.0356774069 : f32
    %258 = vector.broadcast %cst_107 : f32 to vector<8x128xf32>
    %259 = arith.mulf %258, %257 : vector<8x128xf32>
    %cst_108 = arith.constant 0.797884583 : f32
    %260 = vector.broadcast %cst_108 : f32 to vector<8x128xf32>
    %261 = arith.addf %260, %259 : vector<8x128xf32>
    %262 = arith.mulf %256, %261 : vector<8x128xf32>
    %263 = math.tanh %262 : vector<8x128xf32>
    %cst_109 = arith.constant 1.000000e+00 : f32
    %264 = vector.broadcast %cst_109 : f32 to vector<8x128xf32>
    %265 = arith.addf %264, %263 : vector<8x128xf32>
    %266 = arith.mulf %256, %265 : vector<8x128xf32>
    %267 = vector.extract_strided_slice %249 {offsets = [1, 0, 0], sizes = [1, 8, 1], strides = [1, 1, 1]} : vector<3x8x1xf32> to vector<1x8x1xf32>
    %268 = vector.shape_cast %267 : vector<1x8x1xf32> to vector<8x1xf32>
    %269 = vector.broadcast %268 : vector<8x1xf32> to vector<8x128xf32>
    %270 = arith.mulf %266, %269 : vector<8x128xf32>
    %271 = vector.extract_strided_slice %249 {offsets = [2, 0, 0], sizes = [1, 8, 1], strides = [1, 1, 1]} : vector<3x8x1xf32> to vector<1x8x1xf32>
    %272 = vector.shape_cast %271 : vector<1x8x1xf32> to vector<8x1xf32>
    %273 = vector.broadcast %272 : vector<8x1xf32> to vector<8x128xf32>
    %274 = arith.addf %270, %273 : vector<8x128xf32>
    %275 = vector.broadcast %31 : vector<1x128xf32> to vector<8x128xf32>
    %276 = arith.mulf %274, %275 : vector<8x128xf32>
    %277 = arith.addf %169, %276 : vector<8x128xf32>
    %c1_i32_110 = arith.constant 1 : i32
    %278 = tpu.dynamic_rotate %10 by %c1_i32_110 dim 1 : vector<8x128xf32>, i32 -> vector<8x128xf32>
    %c1_i32_111 = arith.constant 1 : i32
    %279 = vector.broadcast %c1_i32_111 : i32 to vector<1x128xi32>
    %280 = arith.cmpi sge, %8, %279 : vector<1x128xi32>
    %cst_112 = arith.constant 0.000000e+00 : f32
    %281 = vector.shape_cast %280 : vector<1x128xi1> to vector<1x128xi1>
    %282 = vector.broadcast %281 : vector<1x128xi1> to vector<8x128xi1>
    %283 = vector.broadcast %cst_112 : f32 to vector<8x128xf32>
    %284 = arith.select %282, %278, %283 : vector<8x128xi1>, vector<8x128xf32>
    %c14 = arith.constant 14 : index
    %c0_113 = arith.constant 0 : index
    %c0_114 = arith.constant 0 : index
    %c0_115 = arith.constant 0 : index
    %285 = vector.load %arg2[%c14, %c0_113, %c0_114, %c0_115] : memref<21x2x8x1xf32, #tpu.memory_space<vmem>>, vector<1x2x8x1xf32>
    %286 = vector.shape_cast %285 : vector<1x2x8x1xf32> to vector<2x8x1xf32>
    %287 = vector.shape_cast %284 : vector<8x128xf32> to vector<1x8x128xf32>
    %288 = vector.broadcast %286 : vector<2x8x1xf32> to vector<2x8x128xf32>
    %289 = vector.broadcast %287 : vector<1x8x128xf32> to vector<2x8x128xf32>
    %290 = arith.mulf %288, %289 : vector<2x8x128xf32>
    %c15 = arith.constant 15 : index
    %c0_116 = arith.constant 0 : index
    %c0_117 = arith.constant 0 : index
    %c0_118 = arith.constant 0 : index
    %291 = vector.load %arg2[%c15, %c0_116, %c0_117, %c0_118] : memref<21x2x8x1xf32, #tpu.memory_space<vmem>>, vector<1x2x8x1xf32>
    %292 = vector.shape_cast %291 : vector<1x2x8x1xf32> to vector<2x8x1xf32>
    %293 = vector.shape_cast %10 : vector<8x128xf32> to vector<1x8x128xf32>
    %294 = vector.broadcast %292 : vector<2x8x1xf32> to vector<2x8x128xf32>
    %295 = vector.broadcast %293 : vector<1x8x128xf32> to vector<2x8x128xf32>
    %296 = arith.mulf %294, %295 : vector<2x8x128xf32>
    %297 = arith.addf %290, %296 : vector<2x8x128xf32>
    %c127_i32_119 = arith.constant 127 : i32
    %298 = tpu.dynamic_rotate %10 by %c127_i32_119 dim 1 : vector<8x128xf32>, i32 -> vector<8x128xf32>
    %c127_i32_120 = arith.constant 127 : i32
    %299 = vector.broadcast %c127_i32_120 : i32 to vector<1x128xi32>
    %300 = arith.cmpi slt, %8, %299 : vector<1x128xi32>
    %cst_121 = arith.constant 0.000000e+00 : f32
    %301 = vector.shape_cast %300 : vector<1x128xi1> to vector<1x128xi1>
    %302 = vector.broadcast %301 : vector<1x128xi1> to vector<8x128xi1>
    %303 = vector.broadcast %cst_121 : f32 to vector<8x128xf32>
    %304 = arith.select %302, %298, %303 : vector<8x128xi1>, vector<8x128xf32>
    %c16 = arith.constant 16 : index
    %c0_122 = arith.constant 0 : index
    %c0_123 = arith.constant 0 : index
    %c0_124 = arith.constant 0 : index
    %305 = vector.load %arg2[%c16, %c0_122, %c0_123, %c0_124] : memref<21x2x8x1xf32, #tpu.memory_space<vmem>>, vector<1x2x8x1xf32>
    %306 = vector.shape_cast %305 : vector<1x2x8x1xf32> to vector<2x8x1xf32>
    %307 = vector.shape_cast %304 : vector<8x128xf32> to vector<1x8x128xf32>
    %308 = vector.broadcast %306 : vector<2x8x1xf32> to vector<2x8x128xf32>
    %309 = vector.broadcast %307 : vector<1x8x128xf32> to vector<2x8x128xf32>
    %310 = arith.mulf %308, %309 : vector<2x8x128xf32>
    %311 = arith.addf %297, %310 : vector<2x8x128xf32>
    %c2_125 = arith.constant 2 : index
    %c0_126 = arith.constant 0 : index
    %c0_127 = arith.constant 0 : index
    %c0_128 = arith.constant 0 : index
    %312 = vector.load %arg3[%c2_125, %c0_126, %c0_127, %c0_128] : memref<3x2x8x1xf32, #tpu.memory_space<vmem>>, vector<1x2x8x1xf32>
    %313 = vector.shape_cast %312 : vector<1x2x8x1xf32> to vector<2x8x1xf32>
    %314 = vector.broadcast %313 : vector<2x8x1xf32> to vector<2x8x128xf32>
    %315 = arith.addf %311, %314 : vector<2x8x128xf32>
    %316 = arith.mulf %315, %315 : vector<2x8x128xf32>
    %cst_129 = arith.constant 0.0356774069 : f32
    %317 = vector.broadcast %cst_129 : f32 to vector<2x8x128xf32>
    %318 = arith.mulf %317, %316 : vector<2x8x128xf32>
    %cst_130 = arith.constant 0.797884583 : f32
    %319 = vector.broadcast %cst_130 : f32 to vector<2x8x128xf32>
    %320 = arith.addf %319, %318 : vector<2x8x128xf32>
    %321 = arith.mulf %315, %320 : vector<2x8x128xf32>
    %322 = math.tanh %321 : vector<2x8x128xf32>
    %cst_131 = arith.constant 1.000000e+00 : f32
    %323 = vector.broadcast %cst_131 : f32 to vector<2x8x128xf32>
    %324 = arith.addf %323, %322 : vector<2x8x128xf32>
    %325 = arith.mulf %315, %324 : vector<2x8x128xf32>
    %326 = vector.shape_cast %325 : vector<2x8x128xf32> to vector<16x128xf32>
    %327 = arith.truncf %326 : vector<16x128xf32> to vector<16x128xbf16>
    %c2_132 = arith.constant 2 : index
    %c0_133 = arith.constant 0 : index
    %c0_134 = arith.constant 0 : index
    %c0_135 = arith.constant 0 : index
    %328 = vector.load %arg5[%c2_132, %c0_133, %c0_134, %c0_135] : memref<3x3x8x1xf32, #tpu.memory_space<vmem>>, vector<1x3x8x1xf32>
    %329 = vector.shape_cast %328 : vector<1x3x8x1xf32> to vector<3x8x1xf32>
    %c2_136 = arith.constant 2 : index
    %c0_137 = arith.constant 0 : index
    %c0_138 = arith.constant 0 : index
    %330 = vector.load %arg4[%c2_136, %c0_137, %c0_138] : memref<3x8x16xbf16, #tpu.memory_space<vmem>>, vector<1x8x16xbf16>
    %331 = vector.shape_cast %330 : vector<1x8x16xbf16> to vector<8x16xbf16>
    %cst_139 = arith.constant dense<0.000000e+00> : vector<8x128xf32>
    %332 = tpu.matmul %331, %327, %cst_139 {dimension_numbers = #tpu.dot_dimension_numbers<[1], [0], [0], [1], [0, 0, 1, 1], [], []>} : vector<8x16xbf16>, vector<16x128xbf16>, vector<8x128xf32> -> vector<8x128xf32>
    %333 = vector.extract_strided_slice %329 {offsets = [0, 0, 0], sizes = [1, 8, 1], strides = [1, 1, 1]} : vector<3x8x1xf32> to vector<1x8x1xf32>
    %334 = vector.shape_cast %333 : vector<1x8x1xf32> to vector<8x1xf32>
    %335 = vector.broadcast %334 : vector<8x1xf32> to vector<8x128xf32>
    %336 = arith.addf %332, %335 : vector<8x128xf32>
    %337 = arith.mulf %336, %336 : vector<8x128xf32>
    %cst_140 = arith.constant 0.0356774069 : f32
    %338 = vector.broadcast %cst_140 : f32 to vector<8x128xf32>
    %339 = arith.mulf %338, %337 : vector<8x128xf32>
    %cst_141 = arith.constant 0.797884583 : f32
    %340 = vector.broadcast %cst_141 : f32 to vector<8x128xf32>
    %341 = arith.addf %340, %339 : vector<8x128xf32>
    %342 = arith.mulf %336, %341 : vector<8x128xf32>
    %343 = math.tanh %342 : vector<8x128xf32>
    %cst_142 = arith.constant 1.000000e+00 : f32
    %344 = vector.broadcast %cst_142 : f32 to vector<8x128xf32>
    %345 = arith.addf %344, %343 : vector<8x128xf32>
    %346 = arith.mulf %336, %345 : vector<8x128xf32>
    %347 = vector.extract_strided_slice %329 {offsets = [1, 0, 0], sizes = [1, 8, 1], strides = [1, 1, 1]} : vector<3x8x1xf32> to vector<1x8x1xf32>
    %348 = vector.shape_cast %347 : vector<1x8x1xf32> to vector<8x1xf32>
    %349 = vector.broadcast %348 : vector<8x1xf32> to vector<8x128xf32>
    %350 = arith.mulf %346, %349 : vector<8x128xf32>
    %351 = vector.extract_strided_slice %329 {offsets = [2, 0, 0], sizes = [1, 8, 1], strides = [1, 1, 1]} : vector<3x8x1xf32> to vector<1x8x1xf32>
    %352 = vector.shape_cast %351 : vector<1x8x1xf32> to vector<8x1xf32>
    %353 = vector.broadcast %352 : vector<8x1xf32> to vector<8x128xf32>
    %354 = arith.addf %350, %353 : vector<8x128xf32>
    %355 = vector.broadcast %32 : vector<1x128xf32> to vector<8x128xf32>
    %356 = arith.mulf %354, %355 : vector<8x128xf32>
    %357 = arith.addf %277, %356 : vector<8x128xf32>
    %358 = arith.mulf %15, %15 : vector<16x128xf32>
    %cst_143 = arith.constant 0.0356774069 : f32
    %359 = vector.broadcast %cst_143 : f32 to vector<16x128xf32>
    %360 = arith.mulf %359, %358 : vector<16x128xf32>
    %cst_144 = arith.constant 0.797884583 : f32
    %361 = vector.broadcast %cst_144 : f32 to vector<16x128xf32>
    %362 = arith.addf %361, %360 : vector<16x128xf32>
    %363 = arith.mulf %15, %362 : vector<16x128xf32>
    %364 = math.tanh %363 : vector<16x128xf32>
    %cst_145 = arith.constant 1.000000e+00 : f32
    %365 = vector.broadcast %cst_145 : f32 to vector<16x128xf32>
    %366 = arith.addf %365, %364 : vector<16x128xf32>
    %367 = arith.mulf %15, %366 : vector<16x128xf32>
    %368 = vector.broadcast %5 : vector<16x1xf32> to vector<16x128xf32>
    %369 = arith.mulf %367, %368 : vector<16x128xf32>
    %370 = vector.broadcast %7 : vector<16x1xf32> to vector<16x128xf32>
    %371 = arith.addf %369, %370 : vector<16x128xf32>
    %372 = arith.truncf %357 : vector<8x128xf32> to vector<8x128xbf16>
    %cst_146 = arith.constant dense<0.000000e+00> : vector<16x128xf32>
    %373 = tpu.matmul %2, %372, %cst_146 {dimension_numbers = #tpu.dot_dimension_numbers<[1], [0], [0], [1], [0, 0, 1, 1], [], []>} : vector<16x8xbf16>, vector<8x128xbf16>, vector<16x128xf32> -> vector<16x128xf32>
    %374 = vector.broadcast %3 : vector<16x1xf32> to vector<16x128xf32>
    %375 = arith.addf %373, %374 : vector<16x128xf32>
    %376 = arith.mulf %375, %375 : vector<16x128xf32>
    %cst_147 = arith.constant 0.0356774069 : f32
    %377 = vector.broadcast %cst_147 : f32 to vector<16x128xf32>
    %378 = arith.mulf %377, %376 : vector<16x128xf32>
    %cst_148 = arith.constant 0.797884583 : f32
    %379 = vector.broadcast %cst_148 : f32 to vector<16x128xf32>
    %380 = arith.addf %379, %378 : vector<16x128xf32>
    %381 = arith.mulf %375, %380 : vector<16x128xf32>
    %382 = math.tanh %381 : vector<16x128xf32>
    %cst_149 = arith.constant 1.000000e+00 : f32
    %383 = vector.broadcast %cst_149 : f32 to vector<16x128xf32>
    %384 = arith.addf %383, %382 : vector<16x128xf32>
    %385 = arith.mulf %375, %384 : vector<16x128xf32>
    %386 = vector.broadcast %5 : vector<16x1xf32> to vector<16x128xf32>
    %387 = arith.mulf %385, %386 : vector<16x128xf32>
    %388 = vector.broadcast %7 : vector<16x1xf32> to vector<16x128xf32>
    %389 = arith.addf %387, %388 : vector<16x128xf32>
    %390 = arith.addf %371, %389 : vector<16x128xf32>
    %c0_150 = arith.constant 0 : index
    %c0_151 = arith.constant 0 : index
    %c0_152 = arith.constant 0 : index
    %391 = vector.load %arg9[%c0_150, %c0_151, %c0_152] : memref<1x16x128xf32, #tpu.memory_space<vmem>>, vector<1x16x128xf32>
    %392 = vector.shape_cast %391 : vector<1x16x128xf32> to vector<16x128xf32>
    %393 = vector.shape_cast %390 : vector<16x128xf32> to vector<1x16x128xf32>
    tpu.vector_store %arg9[%c0_150, %c0_151, %c0_152], %393 {strides = array<i32>} : memref<1x16x128xf32, #tpu.memory_space<vmem>>, vector<1x16x128xf32>,
    return
  }
  func.func @transform_0(%arg0: i32) -> (i32, i32, i32) {
    %c0_i32 = arith.constant 0 : i32
    %c0_i32_0 = arith.constant 0 : i32
    %c0_i32_1 = arith.constant 0 : i32
    return %arg0, %c0_i32, %c0_i32_0 : i32, i32, i32
  }
  func.func @transform_1(%arg0: i32) -> (i32, i32, i32, i32) {
    %c0_i32 = arith.constant 0 : i32
    %c0_i32_0 = arith.constant 0 : i32
    %c0_i32_1 = arith.constant 0 : i32
    %c0_i32_2 = arith.constant 0 : i32
    %c0_i32_3 = arith.constant 0 : i32
    return %c0_i32, %c0_i32_0, %c0_i32_1, %c0_i32_2 : i32, i32, i32, i32
  }
  func.func @transform_2(%arg0: i32) -> (i32, i32, i32, i32) {
    %c0_i32 = arith.constant 0 : i32
    %c0_i32_0 = arith.constant 0 : i32
    %c0_i32_1 = arith.constant 0 : i32
    %c0_i32_2 = arith.constant 0 : i32
    %c0_i32_3 = arith.constant 0 : i32
    return %c0_i32, %c0_i32_0, %c0_i32_1, %c0_i32_2 : i32, i32, i32, i32
  }
  func.func @transform_3(%arg0: i32) -> (i32, i32, i32) {
    %c0_i32 = arith.constant 0 : i32
    %c0_i32_0 = arith.constant 0 : i32
    %c0_i32_1 = arith.constant 0 : i32
    %c0_i32_2 = arith.constant 0 : i32
    return %c0_i32, %c0_i32_0, %c0_i32_1 : i32, i32, i32
  }
  func.func @transform_4(%arg0: i32) -> (i32, i32, i32, i32) {
    %c0_i32 = arith.constant 0 : i32
    %c0_i32_0 = arith.constant 0 : i32
    %c0_i32_1 = arith.constant 0 : i32
    %c0_i32_2 = arith.constant 0 : i32
    %c0_i32_3 = arith.constant 0 : i32
    return %c0_i32, %c0_i32_0, %c0_i32_1, %c0_i32_2 : i32, i32, i32, i32
  }
  func.func @transform_5(%arg0: i32) -> (i32, i32) {
    %c0_i32 = arith.constant 0 : i32
    %c0_i32_0 = arith.constant 0 : i32
    %c0_i32_1 = arith.constant 0 : i32
    return %c0_i32, %c0_i32_0 : i32, i32
  }
  func.func @transform_6(%arg0: i32) -> (i32, i32) {
    %c0_i32 = arith.constant 0 : i32
    %c0_i32_0 = arith.constant 0 : i32
    %c0_i32_1 = arith.constant 0 : i32
    return %c0_i32, %c0_i32_0 : i32, i32
  }
  func.func @transform_7(%arg0: i32) -> (i32, i32, i32) {
    %c0_i32 = arith.constant 0 : i32
    %c0_i32_0 = arith.constant 0 : i32
    %c0_i32_1 = arith.constant 0 : i32
    %c0_i32_2 = arith.constant 0 : i32
    return %c0_i32, %c0_i32_0, %c0_i32_1 : i32, i32, i32
  }
  func.func @transform_8(%arg0: i32) -> (i32, i32, i32) {
    %c0_i32 = arith.constant 0 : i32
    %c0_i32_0 = arith.constant 0 : i32
    %c0_i32_1 = arith.constant 0 : i32
    return %arg0, %c0_i32, %c0_i32_0 : i32, i32, i32
  }
}

</mosaic_0001>

<llo_original>
// kernel: tpu_custom_call.1
$region0: #{tpu_custom_call.1}
  #allocation0 [shape = 'u32[]', space=smem, size = 0x4, offset = 0x4, fixed_abs, tag = 'smem constant byte address 0x4 - core index']
  #allocation1 [shape = 'u32[72,128]{1,0:T(1,128)}', space=vmem, size = 0x9000, scoped, tag = 'internal scratch']
  %s0 = inlined_call_operand.vmem [shape: f32[2,8,128], index: 0, kind: input, shape index: {}]
  %s1 = inlined_call_operand.vmem [shape: f32[21,2,8,1], index: 1, kind: input, shape index: {}]
  %s2 = inlined_call_operand.vmem [shape: f32[3,2,8,1], index: 2, kind: input, shape index: {}]
  %s3 = inlined_call_operand.vmem [shape: bf16[3,8,16], index: 3, kind: input, shape index: {}]
  %s4 = inlined_call_operand.vmem [shape: f32[3,3,8,1], index: 4, kind: input, shape index: {}]
  %s5 = inlined_call_operand.vmem [shape: bf16[19,8], index: 5, kind: input, shape index: {}]
  %s6 = inlined_call_operand.vmem [shape: f32[19,1], index: 6, kind: input, shape index: {}]
  %s7 = inlined_call_operand.vmem [shape: f32[2,16,1], index: 7, kind: input, shape index: {}]
  %s8 = inlined_call_operand.hbm [shape: f32[2,16,128], index: 8, kind: output, shape index: {}]
  %s9 = sld [smem:[#allocation0]]
  $region65: #{tpu_custom_call.1} parent=0
    _
  %s11 = ssub.s32 1, %s9
  %s12 = scalar_select 0, %s11, %s9
  $region1: #{tpu_custom_call.1} parent=0
    #allocation2 [shape = 'u8[16384]{0}', space=vmem, size = 0x4000, scoped, tag = 'output window, operand 0']
    #allocation3 [shape = 's32[2]{0}', space=sflag, size = 0x8, scoped, tag = 'scoped memory for tpu_custom_call.1']
    %13 = vsyncpa [#allocation3], 0
    %s14 = scalar_lea.sflag [#allocation3], 1
    %15 = vsyncpa %s14, 0
    loop: start=0, step=1, limit=4
    $region2: #{tpu_custom_call.1} parent=1 // loop_pre_header
      _
    $region3: #{tpu_custom_call.1} parent=1 // loop_header
      %s17 = sphi 0, %s21
      %p18 = scmp.ge.s32.totalorder %s17, 4
      %s27 = sphi 0, %s29
      %s30 = sphi 0, %s27
      %s31 = sphi 0, %s30
      %s47 = sphi 0, %s31
      %s51 = sphi 0, %s51
      %s53 = sphi 0, %s51
      %s54 = sphi 0, %s53
      %s68 = sphi 0, %s54
      %s72 = sphi 0, %s72
      %s74 = sphi 0, %s72
      %s75 = sphi 0, %s74
      %s89 = sphi 0, %s75
      %s93 = sphi 0, %s93
      %s95 = sphi 0, %s93
      %s96 = sphi 0, %s95
      %s110 = sphi 0, %s96
      %s114 = sphi 0, %s114
      %s116 = sphi 0, %s114
      %s117 = sphi 0, %s116
      %s131 = sphi 0, %s117
      %s135 = sphi 0, %s135
      %s137 = sphi 0, %s135
      %s138 = sphi 0, %s137
      %s152 = sphi 0, %s138
      %s156 = sphi 0, %s156
      %s158 = sphi 0, %s156
      %s159 = sphi 0, %s158
      %s173 = sphi 0, %s159
      %s177 = sphi 0, %s177
      %s179 = sphi 0, %s177
      %s180 = sphi 0, %s179
      %s194 = sphi 0, %s180
      %s200 = sphi 0, %s202
      %s203 = sphi 0, %s200
      %s204 = sphi 0, %s203
      %s220 = sphi 0, %s204
    $region4: #{tpu_custom_call.1} parent=1 // loop_header_branch
      %20 = sbr.rel (%p18) target = $region8
    $region5: #{tpu_custom_call.1} parent=1 // loop_body
      %s22 = ssub.s32 %s17, 1
      %s23 = ssub.s32 %s17, 2
      %s24 = sadd.s32 %s17, 1
      %s25 = ssub.s32 %s17, %s24
      %p26 = scmp.eq.s32.totalorder %s25, 0
      %s28 = sadd.s32 %s27, 1
      %s29 = scalar_select %p26, %s27, %s28
      %p32 = pneg %p26
      %p33 = scmp.eq.s32.totalorder %s17, 1
      %p34 = por %p32, %p33
      %p35 = scmp.ne.s32.totalorder %s27, %s30
      %p36 = scmp.eq.s32.totalorder %s17, 0
      %p37 = por %p35, %p36
      %p38 = scmp.ne.s32.totalorder %s27, %s30
      %p39 = scmp.eq.s32.totalorder %s22, 1
      %p40 = por %p38, %p39
      %p41 = scmp.ne.s32.totalorder %s30, %s31
      %p42 = scmp.eq.s32.totalorder %s22, 0
      %p43 = por %p41, %p42
      %p44 = scmp.ne.s32.totalorder %s30, %s31
      %p45 = scmp.eq.s32.totalorder %s23, 1
      %p46 = por %p44, %p45
      %p48 = scmp.ne.s32.totalorder %s31, %s47
      %p49 = scmp.eq.s32.totalorder %s23, 0
      %p50 = por %p48, %p49
      %s52 = sadd.s32 %s51, 1
      %p55 = scmp.eq.s32.totalorder %s17, 1
      %p56 = scmp.ne.s32.totalorder %s51, %s53
      %p57 = scmp.eq.s32.totalorder %s17, 0
      %p58 = por %p56, %p57
      %p59 = scmp.ne.s32.totalorder %s51, %s53
      %p60 = scmp.eq.s32.totalorder %s22, 1
      %p61 = por %p59, %p60
      %p62 = scmp.ne.s32.totalorder %s53, %s54
      %p63 = scmp.eq.s32.totalorder %s22, 0
      %p64 = por %p62, %p63
      %p65 = scmp.ne.s32.totalorder %s53, %s54
      %p66 = scmp.eq.s32.totalorder %s23, 1
      %p67 = por %p65, %p66
      %p69 = scmp.ne.s32.totalorder %s54, %s68
      %p70 = scmp.eq.s32.totalorder %s23, 0
      %p71 = por %p69, %p70
      %s73 = sadd.s32 %s72, 1
      %p76 = scmp.eq.s32.totalorder %s17, 1
      %p77 = scmp.ne.s32.totalorder %s72, %s74
      %p78 = scmp.eq.s32.totalorder %s17, 0
      %p79 = por %p77, %p78
      %p80 = scmp.ne.s32.totalorder %s72, %s74
      %p81 = scmp.eq.s32.totalorder %s22, 1
      %p82 = por %p80, %p81
      %p83 = scmp.ne.s32.totalorder %s74, %s75
      %p84 = scmp.eq.s32.totalorder %s22, 0
      %p85 = por %p83, %p84
      %p86 = scmp.ne.s32.totalorder %s74, %s75
      %p87 = scmp.eq.s32.totalorder %s23, 1
      %p88 = por %p86, %p87
      %p90 = scmp.ne.s32.totalorder %s75, %s89
      %p91 = scmp.eq.s32.totalorder %s23, 0
      %p92 = por %p90, %p91
      %s94 = sadd.s32 %s93, 1
      %p97 = scmp.eq.s32.totalorder %s17, 1
      %p98 = scmp.ne.s32.totalorder %s93, %s95
      %p99 = scmp.eq.s32.totalorder %s17, 0
      %p100 = por %p98, %p99
      %p101 = scmp.ne.s32.totalorder %s93, %s95
      %p102 = scmp.eq.s32.totalorder %s22, 1
      %p103 = por %p101, %p102
      %p104 = scmp.ne.s32.totalorder %s95, %s96
      %p105 = scmp.eq.s32.totalorder %s22, 0
      %p106 = por %p104, %p105
      %p107 = scmp.ne.s32.totalorder %s95, %s96
      %p108 = scmp.eq.s32.totalorder %s23, 1
      %p109 = por %p107, %p108
      %p111 = scmp.ne.s32.totalorder %s96, %s110
      %p112 = scmp.eq.s32.totalorder %s23, 0
      %p113 = por %p111, %p112
      %s115 = sadd.s32 %s114, 1
      %p118 = scmp.eq.s32.totalorder %s17, 1
      %p119 = scmp.ne.s32.totalorder %s114, %s116
      %p120 = scmp.eq.s32.totalorder %s17, 0
      %p121 = por %p119, %p120
      %p122 = scmp.ne.s32.totalorder %s114, %s116
      %p123 = scmp.eq.s32.totalorder %s22, 1
      %p124 = por %p122, %p123
      %p125 = scmp.ne.s32.totalorder %s116, %s117
      %p126 = scmp.eq.s32.totalorder %s22, 0
      %p127 = por %p125, %p126
      %p128 = scmp.ne.s32.totalorder %s116, %s117
      %p129 = scmp.eq.s32.totalorder %s23, 1
      %p130 = por %p128, %p129
      %p132 = scmp.ne.s32.totalorder %s117, %s131
      %p133 = scmp.eq.s32.totalorder %s23, 0
      %p134 = por %p132, %p133
      %s136 = sadd.s32 %s135, 1
      %p139 = scmp.eq.s32.totalorder %s17, 1
      %p140 = scmp.ne.s32.totalorder %s135, %s137
      %p141 = scmp.eq.s32.totalorder %s17, 0
      %p142 = por %p140, %p141
      %p143 = scmp.ne.s32.totalorder %s135, %s137
      %p144 = scmp.eq.s32.totalorder %s22, 1
      %p145 = por %p143, %p144
      %p146 = scmp.ne.s32.totalorder %s137, %s138
      %p147 = scmp.eq.s32.totalorder %s22, 0
      %p148 = por %p146, %p147
      %p149 = scmp.ne.s32.totalorder %s137, %s138
      %p150 = scmp.eq.s32.totalorder %s23, 1
      %p151 = por %p149, %p150
      %p153 = scmp.ne.s32.totalorder %s138, %s152
      %p154 = scmp.eq.s32.totalorder %s23, 0
      %p155 = por %p153, %p154
      %s157 = sadd.s32 %s156, 1
      %p160 = scmp.eq.s32.totalorder %s17, 1
      %p161 = scmp.ne.s32.totalorder %s156, %s158
      %p162 = scmp.eq.s32.totalorder %s17, 0
      %p163 = por %p161, %p162
      %p164 = scmp.ne.s32.totalorder %s156, %s158
      %p165 = scmp.eq.s32.totalorder %s22, 1
      %p166 = por %p164, %p165
      %p167 = scmp.ne.s32.totalorder %s158, %s159
      %p168 = scmp.eq.s32.totalorder %s22, 0
      %p169 = por %p167, %p168
      %p170 = scmp.ne.s32.totalorder %s158, %s159
      %p171 = scmp.eq.s32.totalorder %s23, 1
      %p172 = por %p170, %p171
      %p174 = scmp.ne.s32.totalorder %s159, %s173
      %p175 = scmp.eq.s32.totalorder %s23, 0
      %p176 = por %p174, %p175
      %s178 = sadd.s32 %s177, 1
      %p181 = scmp.eq.s32.totalorder %s17, 1
      %p182 = scmp.ne.s32.totalorder %s177, %s179
      %p183 = scmp.eq.s32.totalorder %s17, 0
      %p184 = por %p182, %p183
      %p185 = scmp.ne.s32.totalorder %s177, %s179
      %p186 = scmp.eq.s32.totalorder %s22, 1
      %p187 = por %p185, %p186
      %p188 = scmp.ne.s32.totalorder %s179, %s180
      %p189 = scmp.eq.s32.totalorder %s22, 0
      %p190 = por %p188, %p189
      %p191 = scmp.ne.s32.totalorder %s179, %s180
      %p192 = scmp.eq.s32.totalorder %s23, 1
      %p193 = por %p191, %p192
      %p195 = scmp.ne.s32.totalorder %s180, %s194
      %p196 = scmp.eq.s32.totalorder %s23, 0
      %p197 = por %p195, %p196
      %s198 = ssub.s32 %s17, %s24
      %p199 = scmp.eq.s32.totalorder %s198, 0
      %s201 = sadd.s32 %s200, 1
      %s202 = scalar_select %p199, %s200, %s201
      %p205 = pneg %p199
      %p206 = scmp.eq.s32.totalorder %s17, 1
      %p207 = por %p205, %p206
      %p208 = scmp.ne.s32.totalorder %s200, %s203
      %p209 = scmp.eq.s32.totalorder %s17, 0
      %p210 = por %p208, %p209
      %p211 = scmp.ne.s32.totalorder %s200, %s203
      %p212 = scmp.eq.s32.totalorder %s22, 1
      %p213 = por %p211, %p212
      %p214 = scmp.ne.s32.totalorder %s203, %s204
      %p215 = scmp.eq.s32.totalorder %s22, 0
      %p216 = por %p214, %p215
      %p217 = scmp.ne.s32.totalorder %s203, %s204
      %p218 = scmp.eq.s32.totalorder %s23, 1
      %p219 = por %p217, %p218
      %p221 = scmp.ne.s32.totalorder %s204, %s220
      %p222 = scmp.eq.s32.totalorder %s23, 0
      %p223 = por %p221, %p222
      %p224 = scmp.le.s32.totalorder 1, %s17
      %p225 = scmp.lt.s32.totalorder %s17, 3
      %p226 = pnand %p224, %p225
      %p227 = pneg %p226
      // Predicated region
      $region9: #{tpu_custom_call.1} parent=5 // pred_check
        _
      $region10: #{tpu_custom_call.1} parent=5 // pred_check_branch
        %229 = sbr.rel (%p226) target = $region12
      $region11: #{tpu_custom_call.1} parent=5 // pred_region
        %s230 = ssub.s32 %s17, 1
        // Predicated region
        $region13: #{tpu_custom_call.1} parent=11 // pred_check
          %p231 = pneg %p64
        $region14: #{tpu_custom_call.1} parent=11 // pred_check_branch
          %233 = sbr.rel (%p231) target = $region16
        $region15: #{tpu_custom_call.1} parent=11 // pred_region
          _
        $region16: #{tpu_custom_call.1} parent=11 // pred_fallthru
          _
        // Predicated region
        $region17: #{tpu_custom_call.1} parent=11 // pred_check
          %p234 = pneg %p85
        $region18: #{tpu_custom_call.1} parent=11 // pred_check_branch
          %236 = sbr.rel (%p234) target = $region20
        $region19: #{tpu_custom_call.1} parent=11 // pred_region
          _
        $region20: #{tpu_custom_call.1} parent=11 // pred_fallthru
          _
        // Predicated region
        $region21: #{tpu_custom_call.1} parent=11 // pred_check
          %p237 = pneg %p106
        $region22: #{tpu_custom_call.1} parent=11 // pred_check_branch
          %239 = sbr.rel (%p237) target = $region24
        $region23: #{tpu_custom_call.1} parent=11 // pred_region
          _
        $region24: #{tpu_custom_call.1} parent=11 // pred_fallthru
          _
        // Predicated region
        $region25: #{tpu_custom_call.1} parent=11 // pred_check
          %p240 = pneg %p127
        $region26: #{tpu_custom_call.1} parent=11 // pred_check_branch
          %242 = sbr.rel (%p240) target = $region28
        $region27: #{tpu_custom_call.1} parent=11 // pred_region
          _
        $region28: #{tpu_custom_call.1} parent=11 // pred_fallthru
          _
        // Predicated region
        $region29: #{tpu_custom_call.1} parent=11 // pred_check
          %p243 = pneg %p148
        $region30: #{tpu_custom_call.1} parent=11 // pred_check_branch
          %245 = sbr.rel (%p243) target = $region32
        $region31: #{tpu_custom_call.1} parent=11 // pred_region
          _
        $region32: #{tpu_custom_call.1} parent=11 // pred_fallthru
          _
        // Predicated region
        $region33: #{tpu_custom_call.1} parent=11 // pred_check
          %p246 = pneg %p169
        $region34: #{tpu_custom_call.1} parent=11 // pred_check_branch
          %248 = sbr.rel (%p246) target = $region36
        $region35: #{tpu_custom_call.1} parent=11 // pred_region
          _
        $region36: #{tpu_custom_call.1} parent=11 // pred_fallthru
          _
        // Predicated region
        $region37: #{tpu_custom_call.1} parent=11 // pred_check
          %p249 = pneg %p190
        $region38: #{tpu_custom_call.1} parent=11 // pred_check_branch
          %251 = sbr.rel (%p249) target = $region40
        $region39: #{tpu_custom_call.1} parent=11 // pred_region
          _
        $region40: #{tpu_custom_call.1} parent=11 // pred_fallthru
          _
      $region12: #{tpu_custom_call.1} parent=5 // pred_fallthru
        _
      %p252 = scmp.lt.s32.totalorder %s17, 2
      // Predicated region
      $region41: #{tpu_custom_call.1} parent=5 // pred_check
        %p253 = pneg %p252
      $region42: #{tpu_custom_call.1} parent=5 // pred_check_branch
        %255 = sbr.rel (%p253) target = $region44
      $region43: #{tpu_custom_call.1} parent=5 // pred_region
        // Predicated region
        $region45: #{tpu_custom_call.1} parent=43 // pred_check
          %p256 = pneg %p37
        $region46: #{tpu_custom_call.1} parent=43 // pred_check_branch
          %258 = sbr.rel (%p256) target = $region48
        $region47: #{tpu_custom_call.1} parent=43 // pred_region
          %p259 = scmp.lt.s32.totalorder %s17, 1
          %s260 = scalar_select %p259, %s17, 1
          %s261 = smul.addr %s260, 8
          %s262 = scalar_lea.vmem %s0, %s261
        $region48: #{tpu_custom_call.1} parent=43 // pred_fallthru
          _
      $region44: #{tpu_custom_call.1} parent=5 // pred_fallthru
        _
      %p263 = scmp.le.s32.totalorder 1, %s17
      %p264 = scmp.lt.s32.totalorder %s17, 3
      %p265 = pnand %p263, %p264
      %p266 = pneg %p265
      // Predicated region
      $region49: #{tpu_custom_call.1} parent=5 // pred_check
        _
      $region50: #{tpu_custom_call.1} parent=5 // pred_check_branch
        %268 = sbr.rel (%p265) target = $region52
      $region51: #{tpu_custom_call.1} parent=5 // pred_region
        %s269 = ssub.s32 %s17, 1
        %p270 = scmp.lt.s32.totalorder %s22, 1
        %s271 = scalar_select %p270, %s22, 1
        %s272 = smul.addr %s271, 8
        %s273 = scalar_lea.vmem %s0, %s272
        %p274 = pneg %p43
        %p275 = pneg %p40
        %p276 = pneg %p64
        %p277 = pneg %p61
        %p278 = pneg %p85
        %p279 = pneg %p82
        %p280 = pneg %p106
        %p281 = pneg %p103
        %p282 = pneg %p127
        %p283 = pneg %p124
        %p284 = pneg %p148
        %p285 = pneg %p145
        %p286 = pneg %p169
        %p287 = pneg %p166
        %p288 = pneg %p190
        %p289 = pneg %p187
        %p290 = pneg %p216
        %p291 = pneg %p213
        %s292 = sand.u32 %s203, 1
        %s293 = scalar_lea.sflag [#allocation3], %s292
        %s294 = sand.u32 %s203, 1
        %s295 = smul.addr %s294, 16
        %s296 = scalar_lea.vmem [#allocation2], %s295
        %p297 = scmp.lt.s32.totalorder %s22, 1
        %s298 = scalar_select %p297, %s22, 1
        %s299 = smul.addr %s298, 8
        %s300 = scalar_lea.vmem %s0, %s299
        %v302 = vld [vmem:[%s5] sm:$0xf]
        %v303 = vld [vmem:[%s5 + $0x4] sm:$0xf]
        %v304 = vld [vmem:[%s5 + $0x8] sm:$0x3]
        %v305 = vld [vmem:[%s6] sm:$0xff]
        %v306 = vld [vmem:[%s6 + $0x8] sm:$0xff]
        %v307 = vld [vmem:[%s6 + $0x10] sm:$0x7]
        %v308 = vld [vmem:[%s7] sm:$0xff]
        %v309 = vld [vmem:[%s7 + $0x8] sm:$0xff]
        %s310 = scalar_lea.vmem %s7, 16
        %v311 = vld [vmem:[%s310] sm:$0xff]
        %v312 = vld [vmem:[%s310 + $0x8] sm:$0xff]
        %v313 = vlaneseq
        %v314 = vand.u32 %v313, 127
        %v315 = vld [vmem:[%s300] sm:$0xff]
        %v316 = vpack.c.bf16 %v315, %v315
        %318 = vset.pattern.permute.xlu0 0
        %319 = vperm.xlu0 %318, %v305
        %v320 = vpop.permute.xlu0 %319
        %323 = vset.pattern.permute.xlu0 0
        %324 = vperm.xlu0 %323, %v306
        %v325 = vpop.permute.xlu0 %324
        %328 = vset.pattern.permute.xlu0 0
        %329 = vperm.xlu0 %328, %v307
        %v330 = vpop.permute.xlu0 %329
        %v335 = vunpack.c.l.b16 %v302
        %v336 = vunpack.c.l.b16 %v303
        %v337 = vunpack.c.l.b16 %v304
        %v338 = vpack.c.b16 %v336, %v335
        %v339 = vpack.c.b16 %v337, %v337
        %vm340 = vcmask 64512
        %v342 = vsel %vm340, %v338, 0
        %v345 = vsel %vm340, %v339, 0
        %vm347 = vcmask 1043456
        %v349 = vsel %vm347, %v316, 0
        %351 = vmatpush.bf16.msra.mxu0 0
        %352 = vmatpush.bf16.msra.mxu0 0
        %353 = vmatpush.bf16.msra.mxu0 0
        %354 = vmatpush.bf16.msra.mxu0 0
        %355 = vmatpush.bf16.msra.mxu0 0
        %356 = vmatpush.bf16.msra.mxu0 0
        %357 = vmatpush.bf16.msra.mxu0 0
        %358 = vmatpush.bf16.msra.mxu0 %v349
        %359 = vmatmul.bf16.gmra.mxu0 %v342
        %v360 = vpop.f32.mrf.mxu0
        %v361 = vadd.f32 %v320, %v360
        %v362 = vpop.f32.mrf.mxu0
        %v363 = vadd.f32 %v325, %v362
        %364 = vmatmul.bf16.gmra.mxu0 %v345
        %v365 = vpop.f32.mrf.mxu0
        %v366 = vadd.f32 %v330, %v365
        %v367 = vpop.f32.mrf.mxu0
        %368 = vdwg.mxu0
        %v370 = vrot.slane %v366, 1
        %v372 = vmax.f32 %v366, %v370
        %v373 = vrot.slane %v366, 2
        %v375 = vmax.f32 %v372, %v373
        %v376 = vsub.f32 %v366, %v375
        %v377 = vmul.f32 %v376, 1.442695
        %v378 = vpow.pop %v377
        %v380 = vrot.slane %v375, 7
        %v382 = vsub.f32 %v366, %v380
        %v383 = vmul.f32 %v382, 1.442695
        %v384 = vpow.pop %v383
        %v385 = vrot.slane %v375, 6
        %v387 = vsub.f32 %v366, %v385
        %v388 = vmul.f32 %v387, 1.442695
        %v389 = vpow.pop %v388
        %v391 = vrot.slane %v384, 1
        %v393 = vadd.f32 %v378, %v391
        %v395 = vrot.slane %v389, 2
        %v397 = vadd.f32 %v393, %v395
        %v398 = vrcp.pop %v397
        %v399 = vmul.f32 %v378, %v398
        %v401 = vrot.slane %v398, 7
        %v403 = vmul.f32 %v384, %v401
        %v404 = vrot.slane %v398, 6
        %v406 = vmul.f32 %v389, %v404
        %407 = vrot.lane.b32.xlu0 %v315, 3
        %v408 = vpop.permute.xlu0 %407
        %vm409 = vcmp.ge.s32.totalorder %v314, 3
        %v410 = vsel %vm409, 1, 0
        %vm411 = vcmp.eq.s32.totalorder %v410, 1
        %v412 = vsel %vm411, %v408, 0.0
        %v413 = vld [vmem:[%s1] sm:$0xff]
        %v414 = vld [vmem:[%s1 + $0x8] sm:$0xff]
        %416 = vset.pattern.permute.xlu0 0
        %417 = vperm.xlu0 %416, %v413
        %v418 = vpop.permute.xlu0 %417
        %421 = vset.pattern.permute.xlu0 0
        %422 = vperm.xlu0 %421, %v414
        %v423 = vpop.permute.xlu0 %422
        %v425 = vmul.f32 %v418, %v412
        %v426 = vmul.f32 %v423, %v412
        %427 = vrot.lane.b32.xlu0 %v315, 2
        %v428 = vpop.permute.xlu0 %427
        %vm429 = vcmp.ge.s32.totalorder %v314, 2
        %v430 = vsel %vm429, 1, 0
        %vm431 = vcmp.eq.s32.totalorder %v430, 1
        %v432 = vsel %vm431, %v428, 0.0
        %s433 = scalar_lea.vmem %s1, 16
        %v434 = vld [vmem:[%s433] sm:$0xff]
        %v435 = vld [vmem:[%s433 + $0x8] sm:$0xff]
        %437 = vset.pattern.permute.xlu0 0
        %438 = vperm.xlu0 %437, %v434
        %v439 = vpop.permute.xlu0 %438
        %442 = vset.pattern.permute.xlu0 0
        %443 = vperm.xlu0 %442, %v435
        %v444 = vpop.permute.xlu0 %443
        %v446 = vmul.f32 %v439, %v432
        %v447 = vmul.f32 %v444, %v432
        %v448 = vadd.f32 %v425, %v446
        %v449 = vadd.f32 %v426, %v447
        %450 = vrot.lane.b32.xlu0 %v315, 1
        %v451 = vpop.permute.xlu0 %450
        %vm452 = vcmp.ge.s32.totalorder %v314, 1
        %v453 = vsel %vm452, 1, 0
        %vm454 = vcmp.eq.s32.totalorder %v453, 1
        %v455 = vsel %vm454, %v451, 0.0
        %s456 = scalar_lea.vmem %s1, 32
        %v457 = vld [vmem:[%s456] sm:$0xff]
        %v458 = vld [vmem:[%s456 + $0x8] sm:$0xff]
        %460 = vset.pattern.permute.xlu0 0
        %461 = vperm.xlu0 %460, %v457
        %v462 = vpop.permute.xlu0 %461
        %465 = vset.pattern.permute.xlu0 0
        %466 = vperm.xlu0 %465, %v458
        %v467 = vpop.permute.xlu0 %466
        %v469 = vmul.f32 %v462, %v455
        %v470 = vmul.f32 %v467, %v455
        %v471 = vadd.f32 %v448, %v469
        %v472 = vadd.f32 %v449, %v470
        %s473 = scalar_lea.vmem %s1, 48
        %v474 = vld [vmem:[%s473] sm:$0xff]
        %v475 = vld [vmem:[%s473 + $0x8] sm:$0xff]
        %477 = vset.pattern.permute.xlu0 0
        %478 = vperm.xlu0 %477, %v474
        %v479 = vpop.permute.xlu0 %478
        %482 = vset.pattern.permute.xlu0 0
        %483 = vperm.xlu0 %482, %v475
        %v484 = vpop.permute.xlu0 %483
        %v486 = vmul.f32 %v479, %v315
        %v487 = vmul.f32 %v484, %v315
        %v488 = vadd.f32 %v471, %v486
        %v489 = vadd.f32 %v472, %v487
        %490 = vrot.lane.b32.xlu0 %v315, 127
        %v491 = vpop.permute.xlu0 %490
        %vm492 = vcmp.lt.s32.totalorder %v314, 127
        %v493 = vsel %vm492, 1, 0
        %vm494 = vcmp.eq.s32.totalorder %v493, 1
        %v495 = vsel %vm494, %v491, 0.0
        %s496 = scalar_lea.vmem %s1, 64
        %v497 = vld [vmem:[%s496] sm:$0xff]
        %v498 = vld [vmem:[%s496 + $0x8] sm:$0xff]
        %500 = vset.pattern.permute.xlu0 0
        %501 = vperm.xlu0 %500, %v497
        %v502 = vpop.permute.xlu0 %501
        %505 = vset.pattern.permute.xlu0 0
        %506 = vperm.xlu0 %505, %v498
        %v507 = vpop.permute.xlu0 %506
        %v509 = vmul.f32 %v502, %v495
        %v510 = vmul.f32 %v507, %v495
        %v511 = vadd.f32 %v488, %v509
        %v512 = vadd.f32 %v489, %v510
        %513 = vrot.lane.b32.xlu0 %v315, 126
        %v514 = vpop.permute.xlu0 %513
        %vm515 = vcmp.lt.s32.totalorder %v314, 126
        %v516 = vsel %vm515, 1, 0
        %vm517 = vcmp.eq.s32.totalorder %v516, 1
        %v518 = vsel %vm517, %v514, 0.0
        %s519 = scalar_lea.vmem %s1, 80
        %v520 = vld [vmem:[%s519] sm:$0xff]
        %v521 = vld [vmem:[%s519 + $0x8] sm:$0xff]
        %523 = vset.pattern.permute.xlu0 0
        %524 = vperm.xlu0 %523, %v520
        %v525 = vpop.permute.xlu0 %524
        %528 = vset.pattern.permute.xlu0 0
        %529 = vperm.xlu0 %528, %v521
        %v530 = vpop.permute.xlu0 %529
        %v532 = vmul.f32 %v525, %v518
        %v533 = vmul.f32 %v530, %v518
        %v534 = vadd.f32 %v511, %v532
        %v535 = vadd.f32 %v512, %v533
        %536 = vrot.lane.b32.xlu0 %v315, 125
        %v537 = vpop.permute.xlu0 %536
        %vm538 = vcmp.lt.s32.totalorder %v314, 125
        %v539 = vsel %vm538, 1, 0
        %vm540 = vcmp.eq.s32.totalorder %v539, 1
        %v541 = vsel %vm540, %v537, 0.0
        %s542 = scalar_lea.vmem %s1, 96
        %v543 = vld [vmem:[%s542] sm:$0xff]
        %v544 = vld [vmem:[%s542 + $0x8] sm:$0xff]
        %546 = vset.pattern.permute.xlu0 0
        %547 = vperm.xlu0 %546, %v543
        %v548 = vpop.permute.xlu0 %547
        %551 = vset.pattern.permute.xlu0 0
        %552 = vperm.xlu0 %551, %v544
        %v553 = vpop.permute.xlu0 %552
        %v555 = vmul.f32 %v548, %v541
        %v556 = vmul.f32 %v553, %v541
        %v557 = vadd.f32 %v534, %v555
        %v558 = vadd.f32 %v535, %v556
        %v559 = vld [vmem:[%s2] sm:$0xff]
        %v560 = vld [vmem:[%s2 + $0x8] sm:$0xff]
        %562 = vset.pattern.permute.xlu0 0
        %563 = vperm.xlu0 %562, %v559
        %v564 = vpop.permute.xlu0 %563
        %567 = vset.pattern.permute.xlu0 0
        %568 = vperm.xlu0 %567, %v560
        %v569 = vpop.permute.xlu0 %568
        %v571 = vadd.f32 %v557, %v564
        %v572 = vadd.f32 %v558, %v569
        %v573 = vmul.f32 %v571, %v571
        %v574 = vmul.f32 %v572, %v572
        %v575 = vmul.f32 %v573, 0.035677407
        %v576 = vmul.f32 %v574, 0.035677407
        %v577 = vadd.f32 %v575, 0.7978846
        %v578 = vadd.f32 %v576, 0.7978846
        %v579 = vmul.f32 %v571, %v577
        %v580 = vmul.f32 %v572, %v578
        %v581 = vtanh.pop %v579
        %v582 = vtanh.pop %v580
        %v583 = vadd.f32 %v581, 1.0
        %v584 = vadd.f32 %v582, 1.0
        %v585 = vmul.f32 %v571, %v583
        %v586 = vmul.f32 %v572, %v584
        %v587 = vpack.c.bf16 %v586, %v585
        %v588 = vld [vmem:[%s4] sm:$0xff]
        %v589 = vld [vmem:[%s4 + $0x8] sm:$0xff]
        %v590 = vld [vmem:[%s4 + $0x10] sm:$0xff]
        %v591 = vld [vmem:[%s3] sm:$0xf]
        %593 = vset.pattern.permute.xlu0 0
        %594 = vperm.xlu0 %593, %v588
        %v595 = vpop.permute.xlu0 %594
        %vm597 = vcmask 130048
        %v599 = vsel %vm597, %v591, 0
        %601 = vmatpush.bf16.msra.mxu0 0
        %602 = vmatpush.bf16.msra.mxu0 0
        %603 = vmatpush.bf16.msra.mxu0 0
        %604 = vmatpush.bf16.msra.mxu0 0
        %605 = vmatpush.bf16.msra.mxu0 0
        %606 = vmatpush.bf16.msra.mxu0 0
        %607 = vmatpush.bf16.msra.mxu0 0
        %608 = vmatpush.bf16.msra.mxu0 %v587
        %609 = vmatmul.bf16.gmra.mxu0 %v599
        %v610 = vpop.f32.mrf.mxu0
        %v611 = vadd.f32 %v595, %v610
        %v612 = vpop.f32.mrf.mxu0
        %613 = vdwg.mxu0
        %v614 = vmul.f32 %v611, %v611
        %v615 = vmul.f32 %v614, 0.035677407
        %v616 = vadd.f32 %v615, 0.7978846
        %v617 = vmul.f32 %v611, %v616
        %v618 = vtanh.pop %v617
        %v619 = vadd.f32 %v618, 1.0
        %v620 = vmul.f32 %v611, %v619
        %622 = vset.pattern.permute.xlu0 0
        %623 = vperm.xlu0 %622, %v589
        %v624 = vpop.permute.xlu0 %623
        %v626 = vmul.f32 %v620, %v624
        %628 = vset.pattern.permute.xlu0 0
        %629 = vperm.xlu0 %628, %v590
        %v630 = vpop.permute.xlu0 %629
        %v632 = vadd.f32 %v626, %v630
        %v633 = vperm.slane %v399, 0
        %v634 = vmul.f32 %v632, %v633
        %v635 = vadd.f32 %v634, 0.0
        %s636 = scalar_lea.vmem %s1, 112
        %v637 = vld [vmem:[%s636] sm:$0xff]
        %v638 = vld [vmem:[%s636 + $0x8] sm:$0xff]
        %640 = vset.pattern.permute.xlu0 0
        %641 = vperm.xlu0 %640, %v637
        %v642 = vpop.permute.xlu0 %641
        %645 = vset.pattern.permute.xlu0 0
        %646 = vperm.xlu0 %645, %v638
        %v647 = vpop.permute.xlu0 %646
        %v649 = vmul.f32 %v642, %v432
        %v650 = vmul.f32 %v647, %v432
        %s651 = scalar_lea.vmem %s1, 128
        %v652 = vld [vmem:[%s651] sm:$0xff]
        %v653 = vld [vmem:[%s651 + $0x8] sm:$0xff]
        %655 = vset.pattern.permute.xlu0 0
        %656 = vperm.xlu0 %655, %v652
        %v657 = vpop.permute.xlu0 %656
        %660 = vset.pattern.permute.xlu0 0
        %661 = vperm.xlu0 %660, %v653
        %v662 = vpop.permute.xlu0 %661
        %v664 = vmul.f32 %v657, %v455
        %v665 = vmul.f32 %v662, %v455
        %v666 = vadd.f32 %v649, %v664
        %v667 = vadd.f32 %v650, %v665
        %s668 = scalar_lea.vmem %s1, 144
        %v669 = vld [vmem:[%s668] sm:$0xff]
        %v670 = vld [vmem:[%s668 + $0x8] sm:$0xff]
        %672 = vset.pattern.permute.xlu0 0
        %673 = vperm.xlu0 %672, %v669
        %v674 = vpop.permute.xlu0 %673
        %677 = vset.pattern.permute.xlu0 0
        %678 = vperm.xlu0 %677, %v670
        %v679 = vpop.permute.xlu0 %678
        %v681 = vmul.f32 %v674, %v315
        %v682 = vmul.f32 %v679, %v315
        %v683 = vadd.f32 %v666, %v681
        %v684 = vadd.f32 %v667, %v682
        %s685 = scalar_lea.vmem %s1, 160
        %v686 = vld [vmem:[%s685] sm:$0xff]
        %v687 = vld [vmem:[%s685 + $0x8] sm:$0xff]
        %689 = vset.pattern.permute.xlu0 0
        %690 = vperm.xlu0 %689, %v686
        %v691 = vpop.permute.xlu0 %690
        %694 = vset.pattern.permute.xlu0 0
        %695 = vperm.xlu0 %694, %v687
        %v696 = vpop.permute.xlu0 %695
        %v698 = vmul.f32 %v691, %v495
        %v699 = vmul.f32 %v696, %v495
        %v700 = vadd.f32 %v683, %v698
        %v701 = vadd.f32 %v684, %v699
        %s702 = scalar_lea.vmem %s1, 176
        %v703 = vld [vmem:[%s702] sm:$0xff]
        %v704 = vld [vmem:[%s702 + $0x8] sm:$0xff]
        %706 = vset.pattern.permute.xlu0 0
        %707 = vperm.xlu0 %706, %v703
        %v708 = vpop.permute.xlu0 %707
        %711 = vset.pattern.permute.xlu0 0
        %712 = vperm.xlu0 %711, %v704
        %v713 = vpop.permute.xlu0 %712
        %v715 = vmul.f32 %v708, %v518
        %v716 = vmul.f32 %v713, %v518
        %v717 = vadd.f32 %v700, %v715
        %v718 = vadd.f32 %v701, %v716
        %s719 = scalar_lea.vmem %s2, 16
        %v720 = vld [vmem:[%s719] sm:$0xff]
        %v721 = vld [vmem:[%s719 + $0x8] sm:$0xff]
        %723 = vset.pattern.permute.xlu0 0
        %724 = vperm.xlu0 %723, %v720
        %v725 = vpop.permute.xlu0 %724
        %728 = vset.pattern.permute.xlu0 0
        %729 = vperm.xlu0 %728, %v721
        %v730 = vpop.permute.xlu0 %729
        %v732 = vadd.f32 %v717, %v725
        %v733 = vadd.f32 %v718, %v730
        %v734 = vmul.f32 %v732, %v732
        %v735 = vmul.f32 %v733, %v733
        %v736 = vmul.f32 %v734, 0.035677407
        %v737 = vmul.f32 %v735, 0.035677407
        %v738 = vadd.f32 %v736, 0.7978846
        %v739 = vadd.f32 %v737, 0.7978846
        %v740 = vmul.f32 %v732, %v738
        %v741 = vmul.f32 %v733, %v739
        %v742 = vtanh.pop %v740
        %v743 = vtanh.pop %v741
        %v744 = vadd.f32 %v742, 1.0
        %v745 = vadd.f32 %v743, 1.0
        %v746 = vmul.f32 %v732, %v744
        %v747 = vmul.f32 %v733, %v745
        %v748 = vpack.c.bf16 %v747, %v746
        %s749 = scalar_lea.vmem %s4, 24
        %v750 = vld [vmem:[%s749] sm:$0xff]
        %v751 = vld [vmem:[%s749 + $0x8] sm:$0xff]
        %v752 = vld [vmem:[%s749 + $0x10] sm:$0xff]
        %s753 = scalar_lea.vmem %s3, 4
        %v754 = vld [vmem:[%s753] sm:$0xf]
        %756 = vset.pattern.permute.xlu0 0
        %757 = vperm.xlu0 %756, %v750
        %v758 = vpop.permute.xlu0 %757
        %v761 = vsel %vm597, %v754, 0
        %763 = vmatpush.bf16.msra.mxu0 0
        %764 = vmatpush.bf16.msra.mxu0 0
        %765 = vmatpush.bf16.msra.mxu0 0
        %766 = vmatpush.bf16.msra.mxu0 0
        %767 = vmatpush.bf16.msra.mxu0 0
        %768 = vmatpush.bf16.msra.mxu0 0
        %769 = vmatpush.bf16.msra.mxu0 0
        %770 = vmatpush.bf16.msra.mxu0 %v748
        %771 = vmatmul.bf16.gmra.mxu0 %v761
        %v772 = vpop.f32.mrf.mxu0
        %v773 = vadd.f32 %v758, %v772
        %v774 = vpop.f32.mrf.mxu0
        %775 = vdwg.mxu0
        %v776 = vmul.f32 %v773, %v773
        %v777 = vmul.f32 %v776, 0.035677407
        %v778 = vadd.f32 %v777, 0.7978846
        %v779 = vmul.f32 %v773, %v778
        %v780 = vtanh.pop %v779
        %v781 = vadd.f32 %v780, 1.0
        %v782 = vmul.f32 %v773, %v781
        %784 = vset.pattern.permute.xlu0 0
        %785 = vperm.xlu0 %784, %v751
        %v786 = vpop.permute.xlu0 %785
        %v788 = vmul.f32 %v782, %v786
        %790 = vset.pattern.permute.xlu0 0
        %791 = vperm.xlu0 %790, %v752
        %v792 = vpop.permute.xlu0 %791
        %v794 = vadd.f32 %v788, %v792
        %v795 = vperm.slane %v403, 1
        %v796 = vmul.f32 %v794, %v795
        %v797 = vadd.f32 %v635, %v796
        %s798 = scalar_lea.vmem %s1, 224
        %v799 = vld [vmem:[%s798] sm:$0xff]
        %v800 = vld [vmem:[%s798 + $0x8] sm:$0xff]
        %802 = vset.pattern.permute.xlu0 0
        %803 = vperm.xlu0 %802, %v799
        %v804 = vpop.permute.xlu0 %803
        %807 = vset.pattern.permute.xlu0 0
        %808 = vperm.xlu0 %807, %v800
        %v809 = vpop.permute.xlu0 %808
        %v811 = vmul.f32 %v804, %v455
        %v812 = vmul.f32 %v809, %v455
        %s813 = scalar_lea.vmem %s1, 240
        %v814 = vld [vmem:[%s813] sm:$0xff]
        %v815 = vld [vmem:[%s813 + $0x8] sm:$0xff]
        %817 = vset.pattern.permute.xlu0 0
        %818 = vperm.xlu0 %817, %v814
        %v819 = vpop.permute.xlu0 %818
        %822 = vset.pattern.permute.xlu0 0
        %823 = vperm.xlu0 %822, %v815
        %v824 = vpop.permute.xlu0 %823
        %v826 = vmul.f32 %v819, %v315
        %v827 = vmul.f32 %v824, %v315
        %v828 = vadd.f32 %v811, %v826
        %v829 = vadd.f32 %v812, %v827
        %s830 = scalar_lea.vmem %s1, 256
        %v831 = vld [vmem:[%s830] sm:$0xff]
        %v832 = vld [vmem:[%s830 + $0x8] sm:$0xff]
        %834 = vset.pattern.permute.xlu0 0
        %835 = vperm.xlu0 %834, %v831
        %v836 = vpop.permute.xlu0 %835
        %839 = vset.pattern.permute.xlu0 0
        %840 = vperm.xlu0 %839, %v832
        %v841 = vpop.permute.xlu0 %840
        %v843 = vmul.f32 %v836, %v495
        %v844 = vmul.f32 %v841, %v495
        %v845 = vadd.f32 %v828, %v843
        %v846 = vadd.f32 %v829, %v844
        %s847 = scalar_lea.vmem %s2, 32
        %v848 = vld [vmem:[%s847] sm:$0xff]
        %v849 = vld [vmem:[%s847 + $0x8] sm:$0xff]
        %851 = vset.pattern.permute.xlu0 0
        %852 = vperm.xlu0 %851, %v848
        %v853 = vpop.permute.xlu0 %852
        %856 = vset.pattern.permute.xlu0 0
        %857 = vperm.xlu0 %856, %v849
        %v858 = vpop.permute.xlu0 %857
        %v860 = vadd.f32 %v845, %v853
        %v861 = vadd.f32 %v846, %v858
        %v862 = vmul.f32 %v860, %v860
        %v863 = vmul.f32 %v861, %v861
        %v864 = vmul.f32 %v862, 0.035677407
        %v865 = vmul.f32 %v863, 0.035677407
        %v866 = vadd.f32 %v864, 0.7978846
        %v867 = vadd.f32 %v865, 0.7978846
        %v868 = vmul.f32 %v860, %v866
        %v869 = vmul.f32 %v861, %v867
        %v870 = vtanh.pop %v868
        %v871 = vtanh.pop %v869
        %v872 = vadd.f32 %v870, 1.0
        %v873 = vadd.f32 %v871, 1.0
        %v874 = vmul.f32 %v860, %v872
        %v875 = vmul.f32 %v861, %v873
        %v876 = vpack.c.bf16 %v875, %v874
        %s877 = scalar_lea.vmem %s4, 48
        %v878 = vld [vmem:[%s877] sm:$0xff]
        %v879 = vld [vmem:[%s877 + $0x8] sm:$0xff]
        %v880 = vld [vmem:[%s877 + $0x10] sm:$0xff]
        %s881 = scalar_lea.vmem %s3, 8
        %v882 = vld [vmem:[%s881] sm:$0xf]
        %884 = vset.pattern.permute.xlu0 0
        %885 = vperm.xlu0 %884, %v878
        %v886 = vpop.permute.xlu0 %885
        %v889 = vsel %vm597, %v882, 0
        %891 = vmatpush.bf16.msra.mxu0 0
        %892 = vmatpush.bf16.msra.mxu0 0
        %893 = vmatpush.bf16.msra.mxu0 0
        %894 = vmatpush.bf16.msra.mxu0 0
        %895 = vmatpush.bf16.msra.mxu0 0
        %896 = vmatpush.bf16.msra.mxu0 0
        %897 = vmatpush.bf16.msra.mxu0 0
        %898 = vmatpush.bf16.msra.mxu0 %v876
        %899 = vmatmul.bf16.gmra.mxu0 %v889
        %v900 = vpop.f32.mrf.mxu0
        %v901 = vadd.f32 %v886, %v900
        %v902 = vpop.f32.mrf.mxu0
        %903 = vdwg.mxu0
        %v904 = vmul.f32 %v901, %v901
        %v905 = vmul.f32 %v904, 0.035677407
        %v906 = vadd.f32 %v905, 0.7978846
        %v907 = vmul.f32 %v901, %v906
        %v908 = vtanh.pop %v907
        %v909 = vadd.f32 %v908, 1.0
        %v910 = vmul.f32 %v901, %v909
        %912 = vset.pattern.permute.xlu0 0
        %913 = vperm.xlu0 %912, %v879
        %v914 = vpop.permute.xlu0 %913
        %v916 = vmul.f32 %v910, %v914
        %918 = vset.pattern.permute.xlu0 0
        %919 = vperm.xlu0 %918, %v880
        %v920 = vpop.permute.xlu0 %919
        %v922 = vadd.f32 %v916, %v920
        %v923 = vperm.slane %v406, 2
        %v924 = vmul.f32 %v922, %v923
        %v925 = vadd.f32 %v797, %v924
        %v926 = vmul.f32 %v361, %v361
        %v927 = vmul.f32 %v363, %v363
        %v928 = vmul.f32 %v926, 0.035677407
        %v929 = vmul.f32 %v927, 0.035677407
        %v930 = vadd.f32 %v928, 0.7978846
        %v931 = vadd.f32 %v929, 0.7978846
        %v932 = vmul.f32 %v361, %v930
        %v933 = vmul.f32 %v363, %v931
        %v934 = vtanh.pop %v932
        %v935 = vtanh.pop %v933
        %v936 = vadd.f32 %v934, 1.0
        %v937 = vadd.f32 %v935, 1.0
        %v938 = vmul.f32 %v361, %v936
        %v939 = vmul.f32 %v363, %v937
        %941 = vset.pattern.permute.xlu0 0
        %942 = vperm.xlu0 %941, %v308
        %v943 = vpop.permute.xlu0 %942
        %946 = vset.pattern.permute.xlu0 0
        %947 = vperm.xlu0 %946, %v309
        %v948 = vpop.permute.xlu0 %947
        %v950 = vmul.f32 %v938, %v943
        %v951 = vmul.f32 %v939, %v948
        %953 = vset.pattern.permute.xlu0 0
        %954 = vperm.xlu0 %953, %v311
        %v955 = vpop.permute.xlu0 %954
        %958 = vset.pattern.permute.xlu0 0
        %959 = vperm.xlu0 %958, %v312
        %v960 = vpop.permute.xlu0 %959
        %v962 = vadd.f32 %v950, %v955
        %v963 = vadd.f32 %v951, %v960
        %v964 = vpack.c.bf16 %v925, %v925
        %v966 = vsel %vm347, %v964, 0
        %968 = vmatpush.bf16.msra.mxu0 0
        %969 = vmatpush.bf16.msra.mxu0 0
        %970 = vmatpush.bf16.msra.mxu0 0
        %971 = vmatpush.bf16.msra.mxu0 0
        %972 = vmatpush.bf16.msra.mxu0 0
        %973 = vmatpush.bf16.msra.mxu0 0
        %974 = vmatpush.bf16.msra.mxu0 0
        %975 = vmatpush.bf16.msra.mxu0 %v966
        %976 = vmatmul.bf16.gmra.mxu0 %v342
        %v977 = vpop.f32.mrf.mxu0
        %v978 = vadd.f32 %v320, %v977
        %v979 = vpop.f32.mrf.mxu0
        %v980 = vadd.f32 %v325, %v979
        %981 = vdwg.mxu0
        %v982 = vmul.f32 %v978, %v978
        %v983 = vmul.f32 %v980, %v980
        %v984 = vmul.f32 %v982, 0.035677407
        %v985 = vmul.f32 %v983, 0.035677407
        %v986 = vadd.f32 %v984, 0.7978846
        %v987 = vadd.f32 %v985, 0.7978846
        %v988 = vmul.f32 %v978, %v986
        %v989 = vmul.f32 %v980, %v987
        %v990 = vtanh.pop %v988
        %v991 = vtanh.pop %v989
        %v992 = vadd.f32 %v990, 1.0
        %v993 = vadd.f32 %v991, 1.0
        %v994 = vmul.f32 %v978, %v992
        %v995 = vmul.f32 %v980, %v993
        %v996 = vmul.f32 %v994, %v943
        %v997 = vmul.f32 %v995, %v948
        %v998 = vadd.f32 %v996, %v955
        %v999 = vadd.f32 %v997, %v960
        %v1000 = vadd.f32 %v962, %v998
        %v1001 = vadd.f32 %v963, %v999
        %1002 = vst [vmem:[%s296] sm:$0xff] %v1000
        %1003 = vst [vmem:[%s296 + $0x8] sm:$0xff] %v1001
        %s1004 = sand.u32 %s203, 1
        %s1005 = scalar_lea.sflag [#allocation3], %s1004
        %s1006 = sand.u32 %s203, 1
        %s1007 = smul.addr %s1006, 16
        %s1008 = scalar_lea.vmem [#allocation2], %s1007
        // Predicated region
        $region53: #{tpu_custom_call.1} parent=51 // pred_check
          %p1009 = pneg %p213
        $region54: #{tpu_custom_call.1} parent=51 // pred_check_branch
          %1011 = sbr.rel (%p1009) target = $region56
        $region55: #{tpu_custom_call.1} parent=51 // pred_region
          %1013 = vsyncadd %s1005, 0
          %s1014 = smul.addr %s22, 2
          %s1015 = smul.addr %s1014, 8
          %s1016 = scalar_lea.hbm %s8, %s1015
          %s1017 = sshll.u32 %s1008, 4
          %s1018 = int_to_ptr.vmem [resolvable:$true] %s1017
          %s1019 = sshll.u32 %s1016, 4
          %s1020 = int_to_ptr.hbm [resolvable:$true] %s1019
          %1025 = dma.vmem_to_hbm [thread:$0]  %s1018, 256, %s1020, %s1005, 128, 128, 8
        $region56: #{tpu_custom_call.1} parent=51 // pred_fallthru
          _
      $region52: #{tpu_custom_call.1} parent=5 // pred_fallthru
        _
      %p1026 = scmp.le.s32.totalorder 2, %s17
      // Predicated region
      $region57: #{tpu_custom_call.1} parent=5 // pred_check
        %p1027 = pneg %p1026
      $region58: #{tpu_custom_call.1} parent=5 // pred_check_branch
        %1029 = sbr.rel (%p1027) target = $region60
      $region59: #{tpu_custom_call.1} parent=5 // pred_region
        %s1030 = ssub.s32 %s17, 2
        // Predicated region
        $region61: #{tpu_custom_call.1} parent=59 // pred_check
          %p1031 = pneg %p219
        $region62: #{tpu_custom_call.1} parent=59 // pred_check_branch
          %1033 = sbr.rel (%p1031) target = $region64
        $region63: #{tpu_custom_call.1} parent=59 // pred_region
          %s1034 = sand.u32 %s204, 1
          %s1035 = scalar_lea.sflag [#allocation3], %s1034
          %s1036 = sand.u32 %s204, 1
          %s1037 = smul.addr %s1036, 16
          %s1038 = scalar_lea.vmem [#allocation2], %s1037
          %1040 = dma.done %s1035, 256
        $region64: #{tpu_custom_call.1} parent=59 // pred_fallthru
          _
      $region60: #{tpu_custom_call.1} parent=5 // pred_fallthru
        _
    $region6: #{tpu_custom_call.1} parent=1 // loop_footer
      %s21 = sadd.s32 1, %s17
    $region7: #{tpu_custom_call.1} parent=1 // loop_footer_branch
      %16 = sbr.rel target = $region3
    $region8: #{tpu_custom_call.1} parent=1 // loop_exit
      _
    %1041 = vsyncpa [#allocation3], 1
    %s1042 = scalar_lea.sflag [#allocation3], 1
    %1043 = vsyncpa %s1042, 1

</llo_original>
